<compile_context>
chip_gen: v5e
topology: v5e:2x2
jax: 0.10.0
libtpu: 0.0.40
codegen_flags: <defaults>
</compile_context>

<pallas_src>
import functools

import jax
import jax.numpy as jnp
import numpy as np
from jax.experimental import pallas as pl
from jax.experimental.pallas import tpu as pltpu

# MXU operand dtype (f32 accumulate).  Gate nonlinearities / selection in f32.
MM_DTYPE = jnp.bfloat16


def _round_up(v, mult):
    return (v + mult - 1) // mult * mult


def _cdiv(a, b):
    return -(-a // b)


def _vmem_capacity_bytes():
    """Physical VMEM of the local TPU.

    Falls back to the device-kind string so v5e/v6e (128 MiB) are not silently
    penalized by the conservative v7x (64 MiB per-TC) number."""
    try:
        info = pltpu.get_tpu_info()
        cap = int(getattr(info, "vmem_capacity_bytes", 0) or 0)
        if cap > 0:
            return cap
    except Exception:  # pragma: no cover - querying may fail off-device
        pass
    try:
        kind = jax.devices()[0].device_kind.lower()
    except Exception:  # pragma: no cover
        kind = ""
    if ("v5" in kind) or ("v6" in kind):
        return 128 * 1024 * 1024
    return 64 * 1024 * 1024  # conservative (v7x per-TensorCore)


def _choose_tile_n(n_rows, din, m, mp, n_templates, out_w, tile_budget_bytes):
    """Largest row tile (multiple of 8, <=1024) whose working set fits budget,
    capped so the grid still has multiple steps for multi-TensorCore chips."""
    Gp = n_templates * mp
    xh_w = _round_up(din + m, 128)      # lane-padded VMEM footprint of [x|h]
    bytes_per_row = (
        2 * (2 * xh_w)                  # [x|h] bf16 block, double-buffered
        + 2 * (4 * mp)                  # h f32 (padded to mp), double-buffered
        + 2 * (4 * 128)                 # gumbel block (lane-padded), dbl-buf
        + 2 * (4 * out_w)               # merged output, double-buffered
        + 4 * (3 * Gp)                  # matmul A result (rz_pre | gi_n)
        + 4 * (Gp + mp)                 # matmul B result (gh_n | key)
        + 4 * (2 * Gp)                  # rz
        + 4 * Gp                        # n_all
        + 2 * mp                        # bf16 cast of h for matmul B
        + 4 * (4 * mp + 8)              # per-template temporaries + winner
    )
    tile = tile_budget_bytes // max(bytes_per_row, 1)
    tile = max(8, min(1024, (tile // 8) * 8))
    # Guarantee >=2 grid steps (v7x shards "parallel" grid steps across its
    # 2 TensorCores); prefer >=4 steps when tiles stay >=128 rows.
    if n_rows > 8:
        tile = min(tile, max(8, _round_up(_cdiv(n_rows, 2), 8)))
        cap4 = max(8, _round_up(_cdiv(n_rows, 4), 8))
        if cap4 >= 128:
            tile = min(tile, cap4)
    return int(min(tile, _round_up(n_rows, 8)))


def shared_block_gru_kernel(xh_ref, h_ref, g_ref, wa_ref, wb_ref,
                            b_rz_ref, b_in_ref, b_hn_ref, out_ref,
                            *, n_templates, m, mp):
    f32 = jnp.float32
    T = n_templates
    Gp = T * mp
    mm_dtype = wa_ref.dtype

    h = h_ref[...]                       # (tn, mp) f32; lanes >= m are zero
    tn = h.shape[0]

    # Two fused MXU matmuls cover all 3*T GRU gates + the folded attention key.
    #   A: [x | h] @ [[Wi_r Wi_z Wi_n],[Wh_r Wh_z 0]]  -> [rz_pre | gi_n]
    #   B: h @ [Wh_n | w_read @ w_write.T]             -> [gh_n   | key ]
    a = jnp.dot(xh_ref[...], wa_ref[...], preferred_element_type=f32)      # (tn, 3Gp)
    b = jnp.dot(h.astype(mm_dtype), wb_ref[...],
                preferred_element_type=f32)                                # (tn, Gp+mp)

    # Gate-major, 128-aligned layout [ r | z | n ]; r/z biases pre-summed.
    rz = jax.nn.sigmoid(a[:, :2 * Gp] + b_rz_ref[...])
    z_all = rz[:, Gp:]
    n_all = jnp.tanh(a[:, 2 * Gp:] + b_in_ref[...]
                     + rz[:, :Gp] * (b[:, :Gp] + b_hn_ref[...]))
    key = b[:, Gp:]                                                        # (tn, mp)

    gumbel = g_ref[...]                                                    # (tn, T)

    # Streaming hard Gumbel-softmax: keep only the running winner instead of a
    # (T, tn, mp) stack.  Strict ">" reproduces argmax first-max tie-breaking.
    # Padded lanes: z=0.5, n=0, h=0 -> h_t=0; key=0 -> dot unaffected.
    best_val = jnp.full((tn, 1), -jnp.inf, f32)
    best_idx = jnp.zeros((tn, 1), jnp.int32)
    best_h = jnp.zeros((tn, mp), f32)
    for t in range(T):                   # static loop, T is small
        z_t = z_all[:, t * mp:(t + 1) * mp]
        n_t = n_all[:, t * mp:(t + 1) * mp]
        h_t = (1.0 - z_t) * n_t + z_t * h                                  # GRU update, template t
        # logit_t = <h_read, write_key_t>; the per-row constant <h_read, b_write>
        # shifts all T logits equally so it cannot change the hard one-hot.
        y_t = jnp.sum(h_t * key, axis=-1, keepdims=True) + gumbel[:, t:t + 1]
        take = y_t > best_val
        best_val = jnp.where(take, y_t, best_val)
        best_idx = jnp.where(take, jnp.int32(t), best_idx)
        best_h = jnp.where(take, h_t, best_h)

    # Merged lane-dense output slab: hnext in lanes [0, m), hard one-hot att at
    # lane offset m (packed into the hnext padding) or mp (own 128-lane block).
    out_w = out_ref.shape[-1]
    if m + T <= mp:
        col = jax.lax.broadcasted_iota(jnp.int32, (tn, out_w), 1)
        out_ref[...] = best_h + (col == best_idx + m).astype(f32)
    else:
        out_ref[:, :mp] = best_h
        aw = out_w - mp
        col = jax.lax.broadcasted_iota(jnp.int32, (tn, aw), 1)
        out_ref[:, mp:] = (col == best_idx).astype(f32)


def pack_params(params, *, n_templates, matmul_dtype=MM_DTYPE):
    """Wrapper-side packing: 128-aligned, gate-major column groups.

    Each per-template block occupies mp = round_up(m, 128) columns (trailing
    columns zero), so every in-kernel slice is lane-tile aligned."""
    T = n_templates
    m = params["w_read"].shape[0]
    din = params["w_i"].shape[1]
    mp = _round_up(m, 128)
    Gp = T * mp
    f32 = jnp.float32

    def group_w(w, gate):                # w: (3T, K, m) -> (K, Gp)
        K = w.shape[1]
        out = jnp.zeros((K, Gp), f32)
        for t in range(T):
            out = out.at[:, t * mp:t * mp + m].set(w[3 * t + gate])
        return out

    def group_b(b, gate):                # b: (3T, 1, m) -> (1, Gp)
        out = jnp.zeros((1, Gp), f32)
        for t in range(T):
            out = out.at[:, t * mp:t * mp + m].set(b[3 * t + gate])
        return out

    wi_r, wi_z, wi_n = [group_w(params["w_i"], g) for g in range(3)]
    wh_r, wh_z, wh_n = [group_w(params["w_h"], g) for g in range(3)]

    # Matmul A weight: [x | h] @ W_A -> [ r | z | n(input part) ].
    w_a = jnp.concatenate([
        jnp.concatenate([wi_r, wi_z, wi_n], axis=-1),                       # (din, 3Gp)
        jnp.concatenate([wh_r, wh_z, jnp.zeros((m, Gp), f32)], axis=-1),    # (m,   3Gp)
    ], axis=0)                                                              # (din+m, 3Gp)

    # Matmul B weight: h @ W_B -> [ n(hidden part) | key ], rows padded to mp.
    w_key = jnp.zeros((m, mp), f32).at[:, :m].set(
        params["w_read"] @ params["w_write"].T)
    w_b = jnp.concatenate([wh_n, w_key], axis=-1)                           # (m, Gp+mp)
    w_b = jnp.concatenate(
        [w_b, jnp.zeros((mp - m, Gp + mp), f32)], axis=0)                   # (mp, Gp+mp)

    b_rz = jnp.concatenate(
        [group_b(params["b_i"], 0) + group_b(params["b_h"], 0),
         group_b(params["b_i"], 1) + group_b(params["b_h"], 1)], axis=-1)   # (1, 2Gp)
    b_in = group_b(params["b_i"], 2)                                        # (1, Gp)
    b_hn = group_b(params["b_h"], 2)                                        # (1, Gp)

    return {
        "wa": w_a.astype(matmul_dtype),
        "wb": w_b.astype(matmul_dtype),
        "b_rz": b_rz.astype(jnp.float32),
        "b_in": b_in.astype(jnp.float32),
        "b_hn": b_hn.astype(jnp.float32),
    }


def shared_block_gru(x, h, packed, gumbel, *, k, n_templates):
    bs, ninp = x.shape
    nhid = h.shape[1]
    m = nhid // k
    din = ninp // k
    T = n_templates
    N = bs * k
    mp = _round_up(m, 128)
    f32 = jnp.float32

    x_b = x.reshape(N, din)
    h_b = h.reshape(N, m).astype(f32)
    xh_b = jnp.concatenate([x_b, h_b], axis=-1).astype(MM_DTYPE)  # MXU operand
    h_pad = jnp.pad(h_b, ((0, 0), (0, mp - m)))                   # exact f32 state
    g_b = gumbel.astype(f32)                                      # (N, T)

    # Merged output layout: hnext lanes [0, m); att one-hot at `att_off`.
    att_off = m if (m + T) <= mp else mp
    out_w = _round_up(att_off + T, 128)

    # VMEM budget: 3/4 of physical capacity (48 MiB on v7x, 96 MiB on v5e/v6e),
    # minus the resident weights (counted twice to stay safe if the
    # single-buffer pipeline_mode falls back to default double buffering).
    vmem_cap = _vmem_capacity_bytes()
    vmem_limit = int(vmem_cap * 3 // 4)
    weight_bytes = int(
        packed["wa"].size * packed["wa"].dtype.itemsize
        + packed["wb"].size * packed["wb"].dtype.itemsize
        + 4 * (packed["b_rz"].size + packed["b_in"].size + packed["b_hn"].size))
    tile_budget = max(4 * 1024 * 1024, vmem_limit - 2 * weight_bytes - (2 << 20))
    tile_n = _choose_tile_n(N, din, m, mp, T, out_w, tile_budget)

    n_pad = _round_up(N, tile_n)
    if n_pad != N:
        pad = n_pad - N
        xh_b = jnp.pad(xh_b, ((0, pad), (0, 0)))
        h_pad = jnp.pad(h_pad, ((0, pad), (0, 0)))
        g_b = jnp.pad(g_b, ((0, pad), (0, 0)))

    grid = (n_pad // tile_n,)
    kernel = functools.partial(shared_block_gru_kernel,
                               n_templates=T, m=m, mp=mp)

    def row_spec(width):
        return pl.BlockSpec((tile_n, width), lambda i: (i, 0))

    def build_call(single_buffer_weights):
        def const_spec(arr):
            if single_buffer_weights:
                # Constant index_map -> the block never changes; single-buffer
                # it so the second pipeline copy's VMEM goes to bigger tiles.
                return pl.BlockSpec(arr.shape, lambda i: (0, 0),
                                    pipeline_mode=pl.Buffered(1))
            return pl.BlockSpec(arr.shape, lambda i: (0, 0))

        return pl.pallas_call(
            kernel,
            out_shape=jax.ShapeDtypeStruct((n_pad, out_w), f32),
            grid_spec=pltpu.PrefetchScalarGridSpec(
                num_scalar_prefetch=0,
                grid=grid,
                in_specs=[row_spec(din + m), row_spec(mp), row_spec(T),
                          const_spec(packed["wa"]), const_spec(packed["wb"]),
                          const_spec(packed["b_rz"]), const_spec(packed["b_in"]),
                          const_spec(packed["b_hn"])],
                out_specs=row_spec(out_w)),
            compiler_params=pltpu.CompilerParams(
                dimension_semantics=("parallel",),
                vmem_limit_bytes=vmem_limit))

    args = (xh_b, h_pad, g_b, packed["wa"], packed["wb"],
            packed["b_rz"], packed["b_in"], packed["b_hn"])
    try:
        out = build_call(True)(*args)
    except Exception:
        # pipeline_mode=pl.Buffered(1) not supported on this jax/libtpu combo:
        # fall back to default (double-buffered) constant blocks.
        out = build_call(False)(*args)

    hnext = out[:N, :m].reshape(bs, nhid)
    att = out[:N, att_off:att_off + T].reshape(bs, k, T)
    return hnext, att


def reference_jax(x, h, params, gumbel, *, k, n_templates, matmul_dtype=MM_DTYPE):
    """Pure-JAX mirror of the PyTorch forward, using the same MXU precision as
    the kernel (matmul operands in `matmul_dtype`, f32 accumulate / gate math)."""
    bs, ninp = x.shape
    nhid = h.shape[1]
    m = nhid // k
    din = ninp // k
    N = bs * k
    f32 = jnp.float32

    def mm(a, b):
        return jnp.dot(a.astype(matmul_dtype), b.astype(matmul_dtype),
                       preferred_element_type=f32)

    xb = x.reshape(N, din)
    hb = h.reshape(N, m)

    # <h_read, write_key_t> = hnext_t . (h @ (w_read @ w_write.T)) + <h_read, b_write>
    # The trailing term is constant across templates so it cannot change the
    # hard one-hot; like the kernel, it is dropped.
    key = mm(hb, params["w_read"] @ params["w_write"].T)

    hnexts, logit_cols = [], []
    for t in range(n_templates):
        gi_r = mm(xb, params["w_i"][3 * t + 0]) + params["b_i"][3 * t + 0]
        gi_z = mm(xb, params["w_i"][3 * t + 1]) + params["b_i"][3 * t + 1]
        gi_n = mm(xb, params["w_i"][3 * t + 2]) + params["b_i"][3 * t + 2]
        gh_r = mm(hb, params["w_h"][3 * t + 0]) + params["b_h"][3 * t + 0]
        gh_z = mm(hb, params["w_h"][3 * t + 1]) + params["b_h"][3 * t + 1]
        gh_n = mm(hb, params["w_h"][3 * t + 2]) + params["b_h"][3 * t + 2]
        r = jax.nn.sigmoid(gi_r + gh_r)
        z = jax.nn.sigmoid(gi_z + gh_z)
        n = jnp.tanh(gi_n + r * gh_n)
        hn = (1.0 - z) * n + z * hb
        hnexts.append(hn)
        logit_cols.append(jnp.sum(hn * key, axis=-1, keepdims=True))
    logits = jnp.concatenate(logit_cols, axis=1)
    y = logits + gumbel
    att = jax.nn.one_hot(jnp.argmax(y, axis=-1), n_templates, dtype=f32)
    hnext = sum(att[:, t:t + 1] * hnexts[t] for t in range(n_templates))
    return hnext.reshape(bs, nhid), att.reshape(bs, k, n_templates)


def init_params(key, *, ninp, nhid, k, n_templates):
    m = nhid // k
    din = ninp // k
    ks = jax.random.split(key, 7)
    bound = 1.0 / np.sqrt(m)
    return {
        # GRU templates: 3 gates (r, z, n) per template, weights pre-transposed.
        "w_i": jax.random.uniform(ks[0], (n_templates * 3, din, m), jnp.float32, -bound, bound),
        "w_h": jax.random.uniform(ks[1], (n_templates * 3, m, m), jnp.float32, -bound, bound),
        "b_i": jax.random.uniform(ks[2], (n_templates * 3, 1, m), jnp.float32, -bound, bound),
        "b_h": jax.random.uniform(ks[3], (n_templates * 3, 1, m), jnp.float32, -bound, bound),
        # gll_read: GroupLinearLayer(m, 16, 1) -> 0.01 * randn, no bias
        "w_read": 0.01 * jax.random.normal(ks[4], (m, 16), jnp.float32),
        # gll_write: nn.Linear(m, 16) (weight stored transposed as (m, 16))
        "w_write": jax.random.uniform(ks[5], (m, 16), jnp.float32, -bound, bound),
        "b_write": jax.random.uniform(ks[6], (1, 16), jnp.float32, -bound, bound),
    }


if __name__ == "__main__":
    # small shapes consistent with the module
    ninp, nhid, k, n_templates, bs = 16, 32, 4, 3, 2
    m, din, N = nhid // k, ninp // k, bs * k

    root = jax.random.PRNGKey(0)
    k_param, k_x, k_h, k_g = jax.random.split(root, 4)

    params = init_params(k_param, ninp=ninp, nhid=nhid, k=k, n_templates=n_templates)
    x = jax.random.normal(k_x, (bs, ninp), jnp.float32)
    h = jax.random.normal(k_h, (bs, nhid), jnp.float32)

    # deterministic Gumbel(0, 1) noise: -log(-log(U)), U ~ Uniform(0, 1)
    # TODO(synk): torch.nn.functional.gumbel_softmax samples its own noise; the
    # sampling stays in the JAX wrapper, only the hard selection is in-kernel.
    u = jax.random.uniform(k_g, (N, n_templates), jnp.float32, 1e-6, 1.0 - 1e-6)
    gumbel = -jnp.log(-jnp.log(u))

    packed = pack_params(params, n_templates=n_templates)   # pack once, reuse
    hnext, att = shared_block_gru(x, h, packed, gumbel, k=k, n_templates=n_templates)
    jax.block_until_ready((hnext, att))

    hnext_ref, att_ref = reference_jax(x, h, params, gumbel, k=k, n_templates=n_templates)
    np.testing.assert_allclose(np.asarray(hnext), np.asarray(hnext_ref),
                               rtol=1e-4, atol=1e-4)
    np.testing.assert_allclose(np.asarray(att), np.asarray(att_ref), rtol=0, atol=0)

    assert hnext.shape == (bs, nhid) and att.shape == (bs, k, n_templates)
    print("KERNEL_OK")
</pallas_src>

<mosaic_0001>
module attributes {stable_mosaic.version = 11 : i64} {
  func.func @shared_block_gru_kernel(%arg0: i32, %arg1: memref<8x12xbf16, #tpu.memory_space<vmem>>, %arg2: memref<8x128xf32, #tpu.memory_space<vmem>>, %arg3: memref<8x3xf32, #tpu.memory_space<vmem>>, %arg4: memref<12x1152xbf16, #tpu.memory_space<vmem>>, %arg5: memref<128x512xbf16, #tpu.memory_space<vmem>>, %arg6: memref<1x768xf32, #tpu.memory_space<vmem>>, %arg7: memref<1x384xf32, #tpu.memory_space<vmem>>, %arg8: memref<1x384xf32, #tpu.memory_space<vmem>>, %arg9: memref<8x128xf32, #tpu.memory_space<vmem>>) attributes {dimension_semantics = [#tpu.dimension_semantics<parallel>], iteration_bounds = array<i64: 1>, scalar_prefetch = 0 : i64, scratch_operands = 0 : i64, tpu.core_type = #tpu.core_type<tc>, window_params = [{transform_indices = @transform_0, window_bounds = array<i64: 8, 12>}, {transform_indices = @transform_1, window_bounds = array<i64: 8, 128>}, {transform_indices = @transform_2, window_bounds = array<i64: 8, 3>}, {pipeline_mode = #tpu.pipeline_mode<synchronous>, transform_indices = @transform_3, window_bounds = array<i64: 12, 1152>}, {pipeline_mode = #tpu.pipeline_mode<synchronous>, transform_indices = @transform_4, window_bounds = array<i64: 128, 512>}, {pipeline_mode = #tpu.pipeline_mode<synchronous>, transform_indices = @transform_5, window_bounds = array<i64: 1, 768>}, {pipeline_mode = #tpu.pipeline_mode<synchronous>, transform_indices = @transform_6, window_bounds = array<i64: 1, 384>}, {pipeline_mode = #tpu.pipeline_mode<synchronous>, transform_indices = @transform_7, window_bounds = array<i64: 1, 384>}, {transform_indices = @transform_8, window_bounds = array<i64: 8, 128>}]} {
    %c0 = arith.constant 0 : index
    %c0_0 = arith.constant 0 : index
    %0 = vector.load %arg2[%c0, %c0_0] : memref<8x128xf32, #tpu.memory_space<vmem>>, vector<8x128xf32>
    %c0_1 = arith.constant 0 : index
    %c0_2 = arith.constant 0 : index
    %1 = vector.load %arg1[%c0_1, %c0_2] : memref<8x12xbf16, #tpu.memory_space<vmem>>, vector<8x12xbf16>
    %c0_3 = arith.constant 0 : index
    %c0_4 = arith.constant 0 : index
    %2 = vector.load %arg4[%c0_3, %c0_4] : memref<12x1152xbf16, #tpu.memory_space<vmem>>, vector<12x1152xbf16>
    %cst = arith.constant dense<0.000000e+00> : vector<8x1152xf32>
    %3 = tpu.matmul %1, %2, %cst {dimension_numbers = #tpu.dot_dimension_numbers<[1], [0], [0], [1], [0, 0, 1, 1], [], []>} : vector<8x12xbf16>, vector<12x1152xbf16>, vector<8x1152xf32> -> vector<8x1152xf32>
    %4 = arith.truncf %0 : vector<8x128xf32> to vector<8x128xbf16>
    %c0_5 = arith.constant 0 : index
    %c0_6 = arith.constant 0 : index
    %5 = vector.load %arg5[%c0_5, %c0_6] : memref<128x512xbf16, #tpu.memory_space<vmem>>, vector<128x512xbf16>
    %cst_7 = arith.constant dense<0.000000e+00> : vector<8x512xf32>
    %6 = tpu.matmul %4, %5, %cst_7 {dimension_numbers = #tpu.dot_dimension_numbers<[1], [0], [0], [1], [0, 0, 1, 1], [], []>} : vector<8x128xbf16>, vector<128x512xbf16>, vector<8x512xf32> -> vector<8x512xf32>
    %7 = vector.extract_strided_slice %3 {offsets = [0, 0], sizes = [8, 768], strides = [1, 1]} : vector<8x1152xf32> to vector<8x768xf32>
    %c0_8 = arith.constant 0 : index
    %c0_9 = arith.constant 0 : index
    %8 = vector.load %arg6[%c0_8, %c0_9] : memref<1x768xf32, #tpu.memory_space<vmem>>, vector<1x768xf32>
    %9 = vector.broadcast %8 : vector<1x768xf32> to vector<8x768xf32>
    %10 = arith.addf %7, %9 : vector<8x768xf32>
    %11 = arith.negf %10 : vector<8x768xf32>
    %12 = math.exp %11 : vector<8x768xf32>
    %cst_10 = arith.constant 1.000000e+00 : f32
    %13 = vector.broadcast %cst_10 : f32 to vector<8x768xf32>
    %14 = arith.addf %13, %12 : vector<8x768xf32>
    %15 = arith.divf %13, %14 : vector<8x768xf32>
    %16 = vector.extract_strided_slice %15 {offsets = [0, 384], sizes = [8, 384], strides = [1, 1]} : vector<8x768xf32> to vector<8x384xf32>
    %17 = vector.extract_strided_slice %3 {offsets = [0, 768], sizes = [8, 384], strides = [1, 1]} : vector<8x1152xf32> to vector<8x384xf32>
    %c0_11 = arith.constant 0 : index
    %c0_12 = arith.constant 0 : index
    %18 = vector.load %arg7[%c0_11, %c0_12] : memref<1x384xf32, #tpu.memory_space<vmem>>, vector<1x384xf32>
    %19 = vector.broadcast %18 : vector<1x384xf32> to vector<8x384xf32>
    %20 = arith.addf %17, %19 : vector<8x384xf32>
    %21 = vector.extract_strided_slice %15 {offsets = [0, 0], sizes = [8, 384], strides = [1, 1]} : vector<8x768xf32> to vector<8x384xf32>
    %22 = vector.extract_strided_slice %6 {offsets = [0, 0], sizes = [8, 384], strides = [1, 1]} : vector<8x512xf32> to vector<8x384xf32>
    %c0_13 = arith.constant 0 : index
    %c0_14 = arith.constant 0 : index
    %23 = vector.load %arg8[%c0_13, %c0_14] : memref<1x384xf32, #tpu.memory_space<vmem>>, vector<1x384xf32>
    %24 = vector.broadcast %23 : vector<1x384xf32> to vector<8x384xf32>
    %25 = arith.addf %22, %24 : vector<8x384xf32>
    %26 = arith.mulf %21, %25 : vector<8x384xf32>
    %27 = arith.addf %20, %26 : vector<8x384xf32>
    %28 = math.tanh %27 : vector<8x384xf32>
    %29 = vector.extract_strided_slice %6 {offsets = [0, 384], sizes = [8, 128], strides = [1, 1]} : vector<8x512xf32> to vector<8x128xf32>
    %c0_15 = arith.constant 0 : index
    %c0_16 = arith.constant 0 : index
    %30 = vector.load %arg3[%c0_15, %c0_16] : memref<8x3xf32, #tpu.memory_space<vmem>>, vector<8x3xf32>
    %cst_17 = arith.constant 0xFF800000 : f32
    %31 = vector.broadcast %cst_17 : f32 to vector<8x1xf32>
    %c0_i32 = arith.constant 0 : i32
    %32 = vector.broadcast %c0_i32 : i32 to vector<8x1xi32>
    %cst_18 = arith.constant 0.000000e+00 : f32
    %33 = vector.broadcast %cst_18 : f32 to vector<8x128xf32>
    %34 = vector.extract_strided_slice %16 {offsets = [0, 0], sizes = [8, 128], strides = [1, 1]} : vector<8x384xf32> to vector<8x128xf32>
    %35 = vector.extract_strided_slice %28 {offsets = [0, 0], sizes = [8, 128], strides = [1, 1]} : vector<8x384xf32> to vector<8x128xf32>
    %cst_19 = arith.constant 1.000000e+00 : f32
    %36 = vector.broadcast %cst_19 : f32 to vector<8x128xf32>
    %37 = arith.subf %36, %34 : vector<8x128xf32>
    %38 = arith.mulf %37, %35 : vector<8x128xf32>
    %39 = arith.mulf %34, %0 : vector<8x128xf32>
    %40 = arith.addf %38, %39 : vector<8x128xf32>
    %41 = arith.mulf %40, %29 : vector<8x128xf32>
    %cst_20 = arith.constant dense<0.000000e+00> : vector<8xf32>
    %42 = vector.multi_reduction <add>, %41, %cst_20 [1] : vector<8x128xf32> to vector<8xf32>
    %43 = vector.shape_cast %42 : vector<8xf32> to vector<8x1xf32>
    %44 = vector.extract_strided_slice %30 {offsets = [0, 0], sizes = [8, 1], strides = [1, 1]} : vector<8x3xf32> to vector<8x1xf32>
    %45 = arith.addf %43, %44 : vector<8x1xf32>
    %46 = arith.cmpf ogt, %45, %31 : vector<8x1xf32>
    %47 = arith.select %46, %45, %31 : vector<8x1xi1>, vector<8x1xf32>
    %c0_i32_21 = arith.constant 0 : i32
    %48 = vector.broadcast %c0_i32_21 : i32 to vector<8x1xi32>
    %49 = arith.select %46, %48, %32 : vector<8x1xi1>, vector<8x1xi32>
    %50 = vector.shape_cast %46 : vector<8x1xi1> to vector<8x1xi1>
    %51 = vector.broadcast %50 : vector<8x1xi1> to vector<8x128xi1>
    %52 = arith.select %51, %40, %33 : vector<8x128xi1>, vector<8x128xf32>
    %53 = vector.extract_strided_slice %16 {offsets = [0, 128], sizes = [8, 128], strides = [1, 1]} : vector<8x384xf32> to vector<8x128xf32>
    %54 = vector.extract_strided_slice %28 {offsets = [0, 128], sizes = [8, 128], strides = [1, 1]} : vector<8x384xf32> to vector<8x128xf32>
    %cst_22 = arith.constant 1.000000e+00 : f32
    %55 = vector.broadcast %cst_22 : f32 to vector<8x128xf32>
    %56 = arith.subf %55, %53 : vector<8x128xf32>
    %57 = arith.mulf %56, %54 : vector<8x128xf32>
    %58 = arith.mulf %53, %0 : vector<8x128xf32>
    %59 = arith.addf %57, %58 : vector<8x128xf32>
    %60 = arith.mulf %59, %29 : vector<8x128xf32>
    %cst_23 = arith.constant dense<0.000000e+00> : vector<8xf32>
    %61 = vector.multi_reduction <add>, %60, %cst_23 [1] : vector<8x128xf32> to vector<8xf32>
    %62 = vector.shape_cast %61 : vector<8xf32> to vector<8x1xf32>
    %63 = vector.extract_strided_slice %30 {offsets = [0, 1], sizes = [8, 1], strides = [1, 1]} : vector<8x3xf32> to vector<8x1xf32>
    %64 = arith.addf %62, %63 : vector<8x1xf32>
    %65 = arith.cmpf ogt, %64, %47 : vector<8x1xf32>
    %66 = arith.select %65, %64, %47 : vector<8x1xi1>, vector<8x1xf32>
    %c1_i32 = arith.constant 1 : i32
    %67 = vector.broadcast %c1_i32 : i32 to vector<8x1xi32>
    %68 = arith.select %65, %67, %49 : vector<8x1xi1>, vector<8x1xi32>
    %69 = vector.shape_cast %65 : vector<8x1xi1> to vector<8x1xi1>
    %70 = vector.broadcast %69 : vector<8x1xi1> to vector<8x128xi1>
    %71 = arith.select %70, %59, %52 : vector<8x128xi1>, vector<8x128xf32>
    %72 = vector.extract_strided_slice %16 {offsets = [0, 256], sizes = [8, 128], strides = [1, 1]} : vector<8x384xf32> to vector<8x128xf32>
    %73 = vector.extract_strided_slice %28 {offsets = [0, 256], sizes = [8, 128], strides = [1, 1]} : vector<8x384xf32> to vector<8x128xf32>
    %cst_24 = arith.constant 1.000000e+00 : f32
    %74 = vector.broadcast %cst_24 : f32 to vector<8x128xf32>
    %75 = arith.subf %74, %72 : vector<8x128xf32>
    %76 = arith.mulf %75, %73 : vector<8x128xf32>
    %77 = arith.mulf %72, %0 : vector<8x128xf32>
    %78 = arith.addf %76, %77 : vector<8x128xf32>
    %79 = arith.mulf %78, %29 : vector<8x128xf32>
    %cst_25 = arith.constant dense<0.000000e+00> : vector<8xf32>
    %80 = vector.multi_reduction <add>, %79, %cst_25 [1] : vector<8x128xf32> to vector<8xf32>
    %81 = vector.shape_cast %80 : vector<8xf32> to vector<8x1xf32>
    %82 = vector.extract_strided_slice %30 {offsets = [0, 2], sizes = [8, 1], strides = [1, 1]} : vector<8x3xf32> to vector<8x1xf32>
    %83 = arith.addf %81, %82 : vector<8x1xf32>
    %84 = arith.cmpf ogt, %83, %66 : vector<8x1xf32>
    %c2_i32 = arith.constant 2 : i32
    %85 = vector.broadcast %c2_i32 : i32 to vector<8x1xi32>
    %86 = arith.select %84, %85, %68 : vector<8x1xi1>, vector<8x1xi32>
    %87 = vector.shape_cast %84 : vector<8x1xi1> to vector<8x1xi1>
    %88 = vector.broadcast %87 : vector<8x1xi1> to vector<8x128xi1>
    %89 = arith.select %88, %78, %71 : vector<8x128xi1>, vector<8x128xf32>
    %90 = tpu.iota {dimensions = array<i32: 1>} : vector<8x128xi32>
    %c8_i32 = arith.constant 8 : i32
    %91 = vector.broadcast %c8_i32 : i32 to vector<8x1xi32>
    %92 = arith.addi %86, %91 : vector<8x1xi32>
    %93 = vector.broadcast %92 : vector<8x1xi32> to vector<8x128xi32>
    %94 = arith.cmpi eq, %90, %93 : vector<8x128xi32>
    %95 = arith.extui %94 : vector<8x128xi1> to vector<8x128xi32>
    %96 = arith.sitofp %95 : vector<8x128xi32> to vector<8x128xf32>
    %97 = arith.addf %89, %96 : vector<8x128xf32>
    %c0_26 = arith.constant 0 : index
    %c0_27 = arith.constant 0 : index
    %98 = vector.load %arg9[%c0_26, %c0_27] : memref<8x128xf32, #tpu.memory_space<vmem>>, vector<8x128xf32>
    tpu.vector_store %arg9[%c0_26, %c0_27], %97 {strides = array<i32>} : memref<8x128xf32, #tpu.memory_space<vmem>>, vector<8x128xf32>,
    return
  }
  func.func @transform_0(%arg0: i32) -> (i32, i32) {
    %c0_i32 = arith.constant 0 : i32
    %c0_i32_0 = arith.constant 0 : i32
    return %arg0, %c0_i32 : i32, i32
  }
  func.func @transform_1(%arg0: i32) -> (i32, i32) {
    %c0_i32 = arith.constant 0 : i32
    %c0_i32_0 = arith.constant 0 : i32
    return %arg0, %c0_i32 : i32, i32
  }
  func.func @transform_2(%arg0: i32) -> (i32, i32) {
    %c0_i32 = arith.constant 0 : i32
    %c0_i32_0 = arith.constant 0 : i32
    return %arg0, %c0_i32 : i32, i32
  }
  func.func @transform_3(%arg0: i32) -> (i32, i32) {
    %c0_i32 = arith.constant 0 : i32
    %c0_i32_0 = arith.constant 0 : i32
    %c0_i32_1 = arith.constant 0 : i32
    return %c0_i32, %c0_i32_0 : i32, i32
  }
  func.func @transform_4(%arg0: i32) -> (i32, i32) {
    %c0_i32 = arith.constant 0 : i32
    %c0_i32_0 = arith.constant 0 : i32
    %c0_i32_1 = arith.constant 0 : i32
    return %c0_i32, %c0_i32_0 : i32, i32
  }
  func.func @transform_5(%arg0: i32) -> (i32, i32) {
    %c0_i32 = arith.constant 0 : i32
    %c0_i32_0 = arith.constant 0 : i32
    %c0_i32_1 = arith.constant 0 : i32
    return %c0_i32, %c0_i32_0 : i32, i32
  }
  func.func @transform_6(%arg0: i32) -> (i32, i32) {
    %c0_i32 = arith.constant 0 : i32
    %c0_i32_0 = arith.constant 0 : i32
    %c0_i32_1 = arith.constant 0 : i32
    return %c0_i32, %c0_i32_0 : i32, i32
  }
  func.func @transform_7(%arg0: i32) -> (i32, i32) {
    %c0_i32 = arith.constant 0 : i32
    %c0_i32_0 = arith.constant 0 : i32
    %c0_i32_1 = arith.constant 0 : i32
    return %c0_i32, %c0_i32_0 : i32, i32
  }
  func.func @transform_8(%arg0: i32) -> (i32, i32) {
    %c0_i32 = arith.constant 0 : i32
    %c0_i32_0 = arith.constant 0 : i32
    return %arg0, %c0_i32 : i32, i32
  }
}

module attributes {stable_mosaic.version = 11 : i64} {
  func.func @shared_block_gru_kernel(%arg0: i32, %arg1: memref<8x12xbf16, #tpu.memory_space<vmem>>, %arg2: memref<8x128xf32, #tpu.memory_space<vmem>>, %arg3: memref<8x3xf32, #tpu.memory_space<vmem>>, %arg4: memref<12x1152xbf16, #tpu.memory_space<vmem>>, %arg5: memref<128x512xbf16, #tpu.memory_space<vmem>>, %arg6: memref<1x768xf32, #tpu.memory_space<vmem>>, %arg7: memref<1x384xf32, #tpu.memory_space<vmem>>, %arg8: memref<1x384xf32, #tpu.memory_space<vmem>>, %arg9: memref<8x128xf32, #tpu.memory_space<vmem>>) attributes {dimension_semantics = [#tpu.dimension_semantics<parallel>], iteration_bounds = array<i64: 1>, scalar_prefetch = 0 : i64, scratch_operands = 0 : i64, tpu.core_type = #tpu.core_type<tc>, window_params = [{transform_indices = @transform_0, window_bounds = array<i64: 8, 12>}, {transform_indices = @transform_1, window_bounds = array<i64: 8, 128>}, {transform_indices = @transform_2, window_bounds = array<i64: 8, 3>}, {pipeline_mode = #tpu.pipeline_mode<synchronous>, transform_indices = @transform_3, window_bounds = array<i64: 12, 1152>}, {pipeline_mode = #tpu.pipeline_mode<synchronous>, transform_indices = @transform_4, window_bounds = array<i64: 128, 512>}, {pipeline_mode = #tpu.pipeline_mode<synchronous>, transform_indices = @transform_5, window_bounds = array<i64: 1, 768>}, {pipeline_mode = #tpu.pipeline_mode<synchronous>, transform_indices = @transform_6, window_bounds = array<i64: 1, 384>}, {pipeline_mode = #tpu.pipeline_mode<synchronous>, transform_indices = @transform_7, window_bounds = array<i64: 1, 384>}, {transform_indices = @transform_8, window_bounds = array<i64: 8, 128>}]} {
    %c0 = arith.constant 0 : index
    %c0_0 = arith.constant 0 : index
    %0 = vector.load %arg2[%c0, %c0_0] : memref<8x128xf32, #tpu.memory_space<vmem>>, vector<8x128xf32>
    %c0_1 = arith.constant 0 : index
    %c0_2 = arith.constant 0 : index
    %1 = vector.load %arg1[%c0_1, %c0_2] : memref<8x12xbf16, #tpu.memory_space<vmem>>, vector<8x12xbf16>
    %c0_3 = arith.constant 0 : index
    %c0_4 = arith.constant 0 : index
    %2 = vector.load %arg4[%c0_3, %c0_4] : memref<12x1152xbf16, #tpu.memory_space<vmem>>, vector<12x1152xbf16>
    %cst = arith.constant dense<0.000000e+00> : vector<8x1152xf32>
    %3 = tpu.matmul %1, %2, %cst {dimension_numbers = #tpu.dot_dimension_numbers<[1], [0], [0], [1], [0, 0, 1, 1], [], []>} : vector<8x12xbf16>, vector<12x1152xbf16>, vector<8x1152xf32> -> vector<8x1152xf32>
    %4 = arith.truncf %0 : vector<8x128xf32> to vector<8x128xbf16>
    %c0_5 = arith.constant 0 : index
    %c0_6 = arith.constant 0 : index
    %5 = vector.load %arg5[%c0_5, %c0_6] : memref<128x512xbf16, #tpu.memory_space<vmem>>, vector<128x512xbf16>
    %cst_7 = arith.constant dense<0.000000e+00> : vector<8x512xf32>
    %6 = tpu.matmul %4, %5, %cst_7 {dimension_numbers = #tpu.dot_dimension_numbers<[1], [0], [0], [1], [0, 0, 1, 1], [], []>} : vector<8x128xbf16>, vector<128x512xbf16>, vector<8x512xf32> -> vector<8x512xf32>
    %7 = vector.extract_strided_slice %3 {offsets = [0, 0], sizes = [8, 768], strides = [1, 1]} : vector<8x1152xf32> to vector<8x768xf32>
    %c0_8 = arith.constant 0 : index
    %c0_9 = arith.constant 0 : index
    %8 = vector.load %arg6[%c0_8, %c0_9] : memref<1x768xf32, #tpu.memory_space<vmem>>, vector<1x768xf32>
    %9 = vector.broadcast %8 : vector<1x768xf32> to vector<8x768xf32>
    %10 = arith.addf %7, %9 : vector<8x768xf32>
    %11 = arith.negf %10 : vector<8x768xf32>
    %12 = math.exp %11 : vector<8x768xf32>
    %cst_10 = arith.constant 1.000000e+00 : f32
    %13 = vector.broadcast %cst_10 : f32 to vector<8x768xf32>
    %14 = arith.addf %13, %12 : vector<8x768xf32>
    %15 = arith.divf %13, %14 : vector<8x768xf32>
    %16 = vector.extract_strided_slice %15 {offsets = [0, 384], sizes = [8, 384], strides = [1, 1]} : vector<8x768xf32> to vector<8x384xf32>
    %17 = vector.extract_strided_slice %3 {offsets = [0, 768], sizes = [8, 384], strides = [1, 1]} : vector<8x1152xf32> to vector<8x384xf32>
    %c0_11 = arith.constant 0 : index
    %c0_12 = arith.constant 0 : index
    %18 = vector.load %arg7[%c0_11, %c0_12] : memref<1x384xf32, #tpu.memory_space<vmem>>, vector<1x384xf32>
    %19 = vector.broadcast %18 : vector<1x384xf32> to vector<8x384xf32>
    %20 = arith.addf %17, %19 : vector<8x384xf32>
    %21 = vector.extract_strided_slice %15 {offsets = [0, 0], sizes = [8, 384], strides = [1, 1]} : vector<8x768xf32> to vector<8x384xf32>
    %22 = vector.extract_strided_slice %6 {offsets = [0, 0], sizes = [8, 384], strides = [1, 1]} : vector<8x512xf32> to vector<8x384xf32>
    %c0_13 = arith.constant 0 : index
    %c0_14 = arith.constant 0 : index
    %23 = vector.load %arg8[%c0_13, %c0_14] : memref<1x384xf32, #tpu.memory_space<vmem>>, vector<1x384xf32>
    %24 = vector.broadcast %23 : vector<1x384xf32> to vector<8x384xf32>
    %25 = arith.addf %22, %24 : vector<8x384xf32>
    %26 = arith.mulf %21, %25 : vector<8x384xf32>
    %27 = arith.addf %20, %26 : vector<8x384xf32>
    %28 = math.tanh %27 : vector<8x384xf32>
    %29 = vector.extract_strided_slice %6 {offsets = [0, 384], sizes = [8, 128], strides = [1, 1]} : vector<8x512xf32> to vector<8x128xf32>
    %c0_15 = arith.constant 0 : index
    %c0_16 = arith.constant 0 : index
    %30 = vector.load %arg3[%c0_15, %c0_16] : memref<8x3xf32, #tpu.memory_space<vmem>>, vector<8x3xf32>
    %cst_17 = arith.constant 0xFF800000 : f32
    %31 = vector.broadcast %cst_17 : f32 to vector<8x1xf32>
    %c0_i32 = arith.constant 0 : i32
    %32 = vector.broadcast %c0_i32 : i32 to vector<8x1xi32>
    %cst_18 = arith.constant 0.000000e+00 : f32
    %33 = vector.broadcast %cst_18 : f32 to vector<8x128xf32>
    %34 = vector.extract_strided_slice %16 {offsets = [0, 0], sizes = [8, 128], strides = [1, 1]} : vector<8x384xf32> to vector<8x128xf32>
    %35 = vector.extract_strided_slice %28 {offsets = [0, 0], sizes = [8, 128], strides = [1, 1]} : vector<8x384xf32> to vector<8x128xf32>
    %cst_19 = arith.constant 1.000000e+00 : f32
    %36 = vector.broadcast %cst_19 : f32 to vector<8x128xf32>
    %37 = arith.subf %36, %34 : vector<8x128xf32>
    %38 = arith.mulf %37, %35 : vector<8x128xf32>
    %39 = arith.mulf %34, %0 : vector<8x128xf32>
    %40 = arith.addf %38, %39 : vector<8x128xf32>
    %41 = arith.mulf %40, %29 : vector<8x128xf32>
    %cst_20 = arith.constant dense<0.000000e+00> : vector<8xf32>
    %42 = vector.multi_reduction <add>, %41, %cst_20 [1] : vector<8x128xf32> to vector<8xf32>
    %43 = vector.shape_cast %42 : vector<8xf32> to vector<8x1xf32>
    %44 = vector.extract_strided_slice %30 {offsets = [0, 0], sizes = [8, 1], strides = [1, 1]} : vector<8x3xf32> to vector<8x1xf32>
    %45 = arith.addf %43, %44 : vector<8x1xf32>
    %46 = arith.cmpf ogt, %45, %31 : vector<8x1xf32>
    %47 = arith.select %46, %45, %31 : vector<8x1xi1>, vector<8x1xf32>
    %c0_i32_21 = arith.constant 0 : i32
    %48 = vector.broadcast %c0_i32_21 : i32 to vector<8x1xi32>
    %49 = arith.select %46, %48, %32 : vector<8x1xi1>, vector<8x1xi32>
    %50 = vector.shape_cast %46 : vector<8x1xi1> to vector<8x1xi1>
    %51 = vector.broadcast %50 : vector<8x1xi1> to vector<8x128xi1>
    %52 = arith.select %51, %40, %33 : vector<8x128xi1>, vector<8x128xf32>
    %53 = vector.extract_strided_slice %16 {offsets = [0, 128], sizes = [8, 128], strides = [1, 1]} : vector<8x384xf32> to vector<8x128xf32>
    %54 = vector.extract_strided_slice %28 {offsets = [0, 128], sizes = [8, 128], strides = [1, 1]} : vector<8x384xf32> to vector<8x128xf32>
    %cst_22 = arith.constant 1.000000e+00 : f32
    %55 = vector.broadcast %cst_22 : f32 to vector<8x128xf32>
    %56 = arith.subf %55, %53 : vector<8x128xf32>
    %57 = arith.mulf %56, %54 : vector<8x128xf32>
    %58 = arith.mulf %53, %0 : vector<8x128xf32>
    %59 = arith.addf %57, %58 : vector<8x128xf32>
    %60 = arith.mulf %59, %29 : vector<8x128xf32>
    %cst_23 = arith.constant dense<0.000000e+00> : vector<8xf32>
    %61 = vector.multi_reduction <add>, %60, %cst_23 [1] : vector<8x128xf32> to vector<8xf32>
    %62 = vector.shape_cast %61 : vector<8xf32> to vector<8x1xf32>
    %63 = vector.extract_strided_slice %30 {offsets = [0, 1], sizes = [8, 1], strides = [1, 1]} : vector<8x3xf32> to vector<8x1xf32>
    %64 = arith.addf %62, %63 : vector<8x1xf32>
    %65 = arith.cmpf ogt, %64, %47 : vector<8x1xf32>
    %66 = arith.select %65, %64, %47 : vector<8x1xi1>, vector<8x1xf32>
    %c1_i32 = arith.constant 1 : i32
    %67 = vector.broadcast %c1_i32 : i32 to vector<8x1xi32>
    %68 = arith.select %65, %67, %49 : vector<8x1xi1>, vector<8x1xi32>
    %69 = vector.shape_cast %65 : vector<8x1xi1> to vector<8x1xi1>
    %70 = vector.broadcast %69 : vector<8x1xi1> to vector<8x128xi1>
    %71 = arith.select %70, %59, %52 : vector<8x128xi1>, vector<8x128xf32>
    %72 = vector.extract_strided_slice %16 {offsets = [0, 256], sizes = [8, 128], strides = [1, 1]} : vector<8x384xf32> to vector<8x128xf32>
    %73 = vector.extract_strided_slice %28 {offsets = [0, 256], sizes = [8, 128], strides = [1, 1]} : vector<8x384xf32> to vector<8x128xf32>
    %cst_24 = arith.constant 1.000000e+00 : f32
    %74 = vector.broadcast %cst_24 : f32 to vector<8x128xf32>
    %75 = arith.subf %74, %72 : vector<8x128xf32>
    %76 = arith.mulf %75, %73 : vector<8x128xf32>
    %77 = arith.mulf %72, %0 : vector<8x128xf32>
    %78 = arith.addf %76, %77 : vector<8x128xf32>
    %79 = arith.mulf %78, %29 : vector<8x128xf32>
    %cst_25 = arith.constant dense<0.000000e+00> : vector<8xf32>
    %80 = vector.multi_reduction <add>, %79, %cst_25 [1] : vector<8x128xf32> to vector<8xf32>
    %81 = vector.shape_cast %80 : vector<8xf32> to vector<8x1xf32>
    %82 = vector.extract_strided_slice %30 {offsets = [0, 2], sizes = [8, 1], strides = [1, 1]} : vector<8x3xf32> to vector<8x1xf32>
    %83 = arith.addf %81, %82 : vector<8x1xf32>
    %84 = arith.cmpf ogt, %83, %66 : vector<8x1xf32>
    %c2_i32 = arith.constant 2 : i32
    %85 = vector.broadcast %c2_i32 : i32 to vector<8x1xi32>
    %86 = arith.select %84, %85, %68 : vector<8x1xi1>, vector<8x1xi32>
    %87 = vector.shape_cast %84 : vector<8x1xi1> to vector<8x1xi1>
    %88 = vector.broadcast %87 : vector<8x1xi1> to vector<8x128xi1>
    %89 = arith.select %88, %78, %71 : vector<8x128xi1>, vector<8x128xf32>
    %90 = tpu.iota {dimensions = array<i32: 1>} : vector<8x128xi32>
    %c8_i32 = arith.constant 8 : i32
    %91 = vector.broadcast %c8_i32 : i32 to vector<8x1xi32>
    %92 = arith.addi %86, %91 : vector<8x1xi32>
    %93 = vector.broadcast %92 : vector<8x1xi32> to vector<8x128xi32>
    %94 = arith.cmpi eq, %90, %93 : vector<8x128xi32>
    %95 = arith.extui %94 : vector<8x128xi1> to vector<8x128xi32>
    %96 = arith.sitofp %95 : vector<8x128xi32> to vector<8x128xf32>
    %97 = arith.addf %89, %96 : vector<8x128xf32>
    %c0_26 = arith.constant 0 : index
    %c0_27 = arith.constant 0 : index
    %98 = vector.load %arg9[%c0_26, %c0_27] : memref<8x128xf32, #tpu.memory_space<vmem>>, vector<8x128xf32>
    tpu.vector_store %arg9[%c0_26, %c0_27], %97 {strides = array<i32>} : memref<8x128xf32, #tpu.memory_space<vmem>>, vector<8x128xf32>,
    return
  }
  func.func @transform_0(%arg0: i32) -> (i32, i32) {
    %c0_i32 = arith.constant 0 : i32
    %c0_i32_0 = arith.constant 0 : i32
    return %arg0, %c0_i32 : i32, i32
  }
  func.func @transform_1(%arg0: i32) -> (i32, i32) {
    %c0_i32 = arith.constant 0 : i32
    %c0_i32_0 = arith.constant 0 : i32
    return %arg0, %c0_i32 : i32, i32
  }
  func.func @transform_2(%arg0: i32) -> (i32, i32) {
    %c0_i32 = arith.constant 0 : i32
    %c0_i32_0 = arith.constant 0 : i32
    return %arg0, %c0_i32 : i32, i32
  }
  func.func @transform_3(%arg0: i32) -> (i32, i32) {
    %c0_i32 = arith.constant 0 : i32
    %c0_i32_0 = arith.constant 0 : i32
    %c0_i32_1 = arith.constant 0 : i32
    return %c0_i32, %c0_i32_0 : i32, i32
  }
  func.func @transform_4(%arg0: i32) -> (i32, i32) {
    %c0_i32 = arith.constant 0 : i32
    %c0_i32_0 = arith.constant 0 : i32
    %c0_i32_1 = arith.constant 0 : i32
    return %c0_i32, %c0_i32_0 : i32, i32
  }
  func.func @transform_5(%arg0: i32) -> (i32, i32) {
    %c0_i32 = arith.constant 0 : i32
    %c0_i32_0 = arith.constant 0 : i32
    %c0_i32_1 = arith.constant 0 : i32
    return %c0_i32, %c0_i32_0 : i32, i32
  }
  func.func @transform_6(%arg0: i32) -> (i32, i32) {
    %c0_i32 = arith.constant 0 : i32
    %c0_i32_0 = arith.constant 0 : i32
    %c0_i32_1 = arith.constant 0 : i32
    return %c0_i32, %c0_i32_0 : i32, i32
  }
  func.func @transform_7(%arg0: i32) -> (i32, i32) {
    %c0_i32 = arith.constant 0 : i32
    %c0_i32_0 = arith.constant 0 : i32
    %c0_i32_1 = arith.constant 0 : i32
    return %c0_i32, %c0_i32_0 : i32, i32
  }
  func.func @transform_8(%arg0: i32) -> (i32, i32) {
    %c0_i32 = arith.constant 0 : i32
    %c0_i32_0 = arith.constant 0 : i32
    return %arg0, %c0_i32 : i32, i32
  }
}

</mosaic_0001>

<llo_original>
// kernel: tpu_custom_call.1
$region0: #{tpu_custom_call.1}
  #allocation0 [shape = 'u32[]', space=smem, size = 0x4, offset = 0x4, fixed_abs, tag = 'smem constant byte address 0x4 - core index']
  #allocation1 [shape = 'u32[72,128]{1,0:T(1,128)}', space=vmem, size = 0x9000, scoped, tag = 'internal scratch']
  %s0 = inlined_call_operand.hbm [shape: bf16[8,12], index: 0, kind: input, shape index: {}]
  %s1 = inlined_call_operand.vmem [shape: f32[8,128], index: 1, kind: input, shape index: {}]
  %s2 = inlined_call_operand.vmem [shape: f32[8,3], index: 2, kind: input, shape index: {}]
  %s3 = inlined_call_operand.hbm [shape: bf16[12,1152], index: 3, kind: input, shape index: {}]
  %s4 = inlined_call_operand.hbm [shape: bf16[128,512], index: 4, kind: input, shape index: {}]
  %s5 = inlined_call_operand.vmem [shape: f32[1,768], index: 5, kind: input, shape index: {}]
  %s6 = inlined_call_operand.vmem [shape: f32[1,384], index: 6, kind: input, shape index: {}]
  %s7 = inlined_call_operand.hbm [shape: f32[1,384], index: 7, kind: input, shape index: {}]
  %s8 = inlined_call_operand.hbm [shape: f32[8,128], index: 8, kind: output, shape index: {}]
  %s9 = sld [smem:[#allocation0]]
  $region58: #{tpu_custom_call.1} parent=0
    _
  %s11 = ssub.s32 1, %s9
  %s12 = scalar_select 0, %s11, %s9
  $region1: #{tpu_custom_call.1} parent=0
    #allocation2 [shape = 'u8[2048]{0}', space=vmem, size = 0x800, scoped, tag = 'input window, operand 0, single buffered']
    #allocation3 [shape = 's32[1]{0}', space=sflag, size = 0x4, scoped, tag = 'scoped memory for tpu_custom_call.1']
    #allocation4 [shape = 's32[1]{0}', space=sflag, size = 0x4, scoped, tag = 'scoped memory for tpu_custom_call.1']
    #allocation5 [shape = 'u8[36864]{0}', space=vmem, size = 0x9000, scoped, tag = 'input window, operand 3, single buffered']
    #allocation6 [shape = 's32[1]{0}', space=sflag, size = 0x4, scoped, tag = 'scoped memory for tpu_custom_call.1']
    #allocation7 [shape = 'u8[131072]{0}', space=vmem, size = 0x20000, scoped, tag = 'input window, operand 4, single buffered']
    #allocation8 [shape = 'u8[1536]{0}', space=vmem, size = 0x800, scoped, tag = 'input window, operand 7, single buffered']
    #allocation9 [shape = 's32[1]{0}', space=sflag, size = 0x4, scoped, tag = 'scoped memory for tpu_custom_call.1']
    #allocation10 [shape = 'u8[4096]{0}', space=vmem, size = 0x1000, scoped, tag = 'output window, operand 0, single buffered']
    %13 = vsyncpa [#allocation3], 0
    %14 = vsyncpa [#allocation6], 0
    %15 = vsyncpa [#allocation9], 0
    %16 = vsyncpa [#allocation4], 0
    // Predicated region
    $region2: #{tpu_custom_call.1} parent=1 // pred_check
      _
    $region3: #{tpu_custom_call.1} parent=1 // pred_check_branch
      %18 = sbr.rel (0) target = $region5
    $region4: #{tpu_custom_call.1} parent=1 // pred_region
      %20 = vsyncadd [#allocation3], 0
      %s22 = sshll.u32 %s0, 4
      %s23 = int_to_ptr.hbm [resolvable:$true] %s22
      %s24 = sshll.u32 [#allocation2], 4
      %s25 = int_to_ptr.vmem [resolvable:$true] %s24
      %27 = dma.hbm_to_vmem [thread:$0]  %s23, 64, %s25, [#allocation3]
    $region5: #{tpu_custom_call.1} parent=1 // pred_fallthru
      _
    // Predicated region
    $region6: #{tpu_custom_call.1} parent=1 // pred_check
      _
    $region7: #{tpu_custom_call.1} parent=1 // pred_check_branch
      %29 = sbr.rel (0) target = $region9
    $region8: #{tpu_custom_call.1} parent=1 // pred_region
      _
    $region9: #{tpu_custom_call.1} parent=1 // pred_fallthru
      _
    // Predicated region
    $region10: #{tpu_custom_call.1} parent=1 // pred_check
      _
    $region11: #{tpu_custom_call.1} parent=1 // pred_check_branch
      %31 = sbr.rel (0) target = $region13
    $region12: #{tpu_custom_call.1} parent=1 // pred_region
      _
    $region13: #{tpu_custom_call.1} parent=1 // pred_fallthru
      _
    // Predicated region
    $region14: #{tpu_custom_call.1} parent=1 // pred_check
      _
    $region15: #{tpu_custom_call.1} parent=1 // pred_check_branch
      %33 = sbr.rel (0) target = $region17
    $region16: #{tpu_custom_call.1} parent=1 // pred_region
      %35 = vsyncadd [#allocation6], 0
      %s36 = sshll.u32 %s3, 4
      %s37 = int_to_ptr.hbm [resolvable:$true] %s36
      %s38 = sshll.u32 [#allocation5], 4
      %s39 = int_to_ptr.vmem [resolvable:$true] %s38
      %44 = dma.hbm_to_vmem [thread:$0]  %s37, 1152, %s39, [#allocation6], 576, 576, 36
    $region17: #{tpu_custom_call.1} parent=1 // pred_fallthru
      _
    // Predicated region
    $region18: #{tpu_custom_call.1} parent=1 // pred_check
      _
    $region19: #{tpu_custom_call.1} parent=1 // pred_check_branch
      %46 = sbr.rel (0) target = $region21
    $region20: #{tpu_custom_call.1} parent=1 // pred_region
      %48 = vsyncadd [#allocation6], 0
      %s49 = sshll.u32 %s4, 4
      %s50 = int_to_ptr.hbm [resolvable:$true] %s49
      %s51 = sshll.u32 [#allocation7], 4
      %s52 = int_to_ptr.vmem [resolvable:$true] %s51
      %57 = dma.hbm_to_vmem [thread:$0]  %s50, 4096, %s52, [#allocation6], 256, 256, 16
    $region21: #{tpu_custom_call.1} parent=1 // pred_fallthru
      _
    // Predicated region
    $region22: #{tpu_custom_call.1} parent=1 // pred_check
      _
    $region23: #{tpu_custom_call.1} parent=1 // pred_check_branch
      %59 = sbr.rel (0) target = $region25
    $region24: #{tpu_custom_call.1} parent=1 // pred_region
      _
    $region25: #{tpu_custom_call.1} parent=1 // pred_fallthru
      _
    // Predicated region
    $region26: #{tpu_custom_call.1} parent=1 // pred_check
      _
    $region27: #{tpu_custom_call.1} parent=1 // pred_check_branch
      %61 = sbr.rel (0) target = $region29
    $region28: #{tpu_custom_call.1} parent=1 // pred_region
      _
    $region29: #{tpu_custom_call.1} parent=1 // pred_fallthru
      _
    // Predicated region
    $region30: #{tpu_custom_call.1} parent=1 // pred_check
      _
    $region31: #{tpu_custom_call.1} parent=1 // pred_check_branch
      %63 = sbr.rel (0) target = $region33
    $region32: #{tpu_custom_call.1} parent=1 // pred_region
      %65 = vsyncadd [#allocation9], 0
      %s67 = sshll.u32 %s7, 4
      %s68 = int_to_ptr.hbm [resolvable:$true] %s67
      %s69 = sshll.u32 [#allocation8], 4
      %s70 = int_to_ptr.vmem [resolvable:$true] %s69
      %72 = dma.hbm_to_vmem [thread:$0]  %s68, 48, %s70, [#allocation9]
    $region33: #{tpu_custom_call.1} parent=1 // pred_fallthru
      _
    // Predicated region
    $region34: #{tpu_custom_call.1} parent=1 // pred_check
      _
    $region35: #{tpu_custom_call.1} parent=1 // pred_check_branch
      %74 = sbr.rel (0) target = $region37
    $region36: #{tpu_custom_call.1} parent=1 // pred_region
      %76 = dma.done [#allocation3], 64
    $region37: #{tpu_custom_call.1} parent=1 // pred_fallthru
      _
    // Predicated region
    $region38: #{tpu_custom_call.1} parent=1 // pred_check
      _
    $region39: #{tpu_custom_call.1} parent=1 // pred_check_branch
      %78 = sbr.rel (0) target = $region41
    $region40: #{tpu_custom_call.1} parent=1 // pred_region
      %80 = dma.done [#allocation6], 1152
    $region41: #{tpu_custom_call.1} parent=1 // pred_fallthru
      _
    // Predicated region
    $region42: #{tpu_custom_call.1} parent=1 // pred_check
      _
    $region43: #{tpu_custom_call.1} parent=1 // pred_check_branch
      %82 = sbr.rel (0) target = $region45
    $region44: #{tpu_custom_call.1} parent=1 // pred_region
      %84 = dma.done [#allocation6], 4096
    $region45: #{tpu_custom_call.1} parent=1 // pred_fallthru
      _
    // Predicated region
    $region46: #{tpu_custom_call.1} parent=1 // pred_check
      _
    $region47: #{tpu_custom_call.1} parent=1 // pred_check_branch
      %86 = sbr.rel (0) target = $region49
    $region48: #{tpu_custom_call.1} parent=1 // pred_region
      %88 = dma.done [#allocation9], 48
    $region49: #{tpu_custom_call.1} parent=1 // pred_fallthru
      _
    %v90 = vld [vmem:[%s1] sm:$0xff]
    %v91 = vld [vmem:[#allocation2] sm:$0xf]
    %v92 = vld [vmem:[#allocation5] sm:$0xff]
    %v93 = vld [vmem:[#allocation5 + $0x8] sm:$0xff]
    %v94 = vld [vmem:[#allocation5 + $0x10] sm:$0xff]
    %v95 = vld [vmem:[#allocation5 + $0x18] sm:$0xff]
    %v96 = vld [vmem:[#allocation5 + $0x20] sm:$0xf]
    %v97 = vld [vmem:[#allocation5 + $0x24] sm:$0x33]
    %v98 = vld [vmem:[#allocation5 + $0x2c] sm:$0x33]
    %v99 = vld [vmem:[#allocation5 + $0x34] sm:$0x33]
    %v100 = vld [vmem:[#allocation5 + $0x3c] sm:$0x33]
    %v101 = vld [vmem:[#allocation5 + $0x44] sm:$0x3]
    %v112 = vunpack.c.l.b16 %v92
    %v113 = vunpack.c.h.b16 %v92
    %v114 = vunpack.c.l.b16 %v93
    %v115 = vunpack.c.h.b16 %v93
    %v116 = vunpack.c.l.b16 %v94
    %v117 = vunpack.c.h.b16 %v94
    %v118 = vunpack.c.l.b16 %v95
    %v119 = vunpack.c.h.b16 %v95
    %v120 = vunpack.c.l.b16 %v96
    %v121 = vunpack.c.l.b16 %v97
    %v122 = vunpack.c.h.b16 %v97
    %v123 = vunpack.c.l.b16 %v98
    %v124 = vunpack.c.h.b16 %v98
    %v125 = vunpack.c.l.b16 %v99
    %v126 = vunpack.c.h.b16 %v99
    %v127 = vunpack.c.l.b16 %v100
    %v128 = vunpack.c.h.b16 %v100
    %v129 = vunpack.c.l.b16 %v101
    %v130 = vpack.c.b16 %v121, %v112
    %v131 = vpack.c.b16 %v122, %v113
    %v132 = vpack.c.b16 %v123, %v114
    %v133 = vpack.c.b16 %v124, %v115
    %v134 = vpack.c.b16 %v125, %v116
    %v135 = vpack.c.b16 %v126, %v117
    %v136 = vpack.c.b16 %v127, %v118
    %v137 = vpack.c.b16 %v128, %v119
    %v138 = vpack.c.b16 %v129, %v120
    %vm139 = vcmask 97280
    %v141 = vsel %vm139, %v91, 0
    %vm143 = vcmask 1045504
    %v145 = vsel %vm143, %v130, 0
    %v148 = vsel %vm143, %v131, 0
    %v151 = vsel %vm143, %v132, 0
    %v154 = vsel %vm143, %v133, 0
    %v157 = vsel %vm143, %v134, 0
    %v160 = vsel %vm143, %v135, 0
    %v163 = vsel %vm143, %v136, 0
    %v166 = vsel %vm143, %v137, 0
    %v169 = vsel %vm143, %v138, 0
    %171 = vmatpush.bf16.msra.mxu0 0
    %172 = vmatpush.bf16.msra.mxu0 0
    %173 = vmatpush.bf16.msra.mxu0 0
    %174 = vmatpush.bf16.msra.mxu0 0
    %175 = vmatpush.bf16.msra.mxu0 0
    %176 = vmatpush.bf16.msra.mxu0 0
    %177 = vmatpush.bf16.msra.mxu0 0
    %178 = vmatpush.bf16.msra.mxu0 %v145
    %179 = vmatmul.bf16.gmra.mxu0 %v141
    %v180 = vpop.f32.mrf.mxu0
    %v181 = vadd.f32 0.0, %v180
    %v182 = vpop.f32.mrf.mxu0
    %183 = vdwg.mxu0
    %184 = vmatpush.bf16.msra.mxu0 0
    %185 = vmatpush.bf16.msra.mxu0 0
    %186 = vmatpush.bf16.msra.mxu0 0
    %187 = vmatpush.bf16.msra.mxu0 0
    %188 = vmatpush.bf16.msra.mxu0 0
    %189 = vmatpush.bf16.msra.mxu0 0
    %190 = vmatpush.bf16.msra.mxu0 0
    %191 = vmatpush.bf16.msra.mxu0 %v148
    %192 = vmatmul.bf16.gmra.mxu0 %v141
    %v193 = vpop.f32.mrf.mxu0
    %v194 = vadd.f32 0.0, %v193
    %v195 = vpop.f32.mrf.mxu0
    %196 = vdwg.mxu0
    %197 = vmatpush.bf16.msra.mxu0 0
    %198 = vmatpush.bf16.msra.mxu0 0
    %199 = vmatpush.bf16.msra.mxu0 0
    %200 = vmatpush.bf16.msra.mxu0 0
    %201 = vmatpush.bf16.msra.mxu0 0
    %202 = vmatpush.bf16.msra.mxu0 0
    %203 = vmatpush.bf16.msra.mxu0 0
    %204 = vmatpush.bf16.msra.mxu0 %v151
    %205 = vmatmul.bf16.gmra.mxu0 %v141
    %v206 = vpop.f32.mrf.mxu0
    %v207 = vadd.f32 0.0, %v206
    %v208 = vpop.f32.mrf.mxu0
    %209 = vdwg.mxu0
    %210 = vmatpush.bf16.msra.mxu0 0
    %211 = vmatpush.bf16.msra.mxu0 0
    %212 = vmatpush.bf16.msra.mxu0 0
    %213 = vmatpush.bf16.msra.mxu0 0
    %214 = vmatpush.bf16.msra.mxu0 0
    %215 = vmatpush.bf16.msra.mxu0 0
    %216 = vmatpush.bf16.msra.mxu0 0
    %217 = vmatpush.bf16.msra.mxu0 %v154
    %218 = vmatmul.bf16.gmra.mxu0 %v141
    %v219 = vpop.f32.mrf.mxu0
    %v220 = vadd.f32 0.0, %v219
    %v221 = vpop.f32.mrf.mxu0
    %222 = vdwg.mxu0
    %223 = vmatpush.bf16.msra.mxu0 0
    %224 = vmatpush.bf16.msra.mxu0 0
    %225 = vmatpush.bf16.msra.mxu0 0
    %226 = vmatpush.bf16.msra.mxu0 0
    %227 = vmatpush.bf16.msra.mxu0 0
    %228 = vmatpush.bf16.msra.mxu0 0
    %229 = vmatpush.bf16.msra.mxu0 0
    %230 = vmatpush.bf16.msra.mxu0 %v157
    %231 = vmatmul.bf16.gmra.mxu0 %v141
    %v232 = vpop.f32.mrf.mxu0
    %v233 = vadd.f32 0.0, %v232
    %v234 = vpop.f32.mrf.mxu0
    %235 = vdwg.mxu0
    %236 = vmatpush.bf16.msra.mxu0 0
    %237 = vmatpush.bf16.msra.mxu0 0
    %238 = vmatpush.bf16.msra.mxu0 0
    %239 = vmatpush.bf16.msra.mxu0 0
    %240 = vmatpush.bf16.msra.mxu0 0
    %241 = vmatpush.bf16.msra.mxu0 0
    %242 = vmatpush.bf16.msra.mxu0 0
    %243 = vmatpush.bf16.msra.mxu0 %v160
    %244 = vmatmul.bf16.gmra.mxu0 %v141
    %v245 = vpop.f32.mrf.mxu0
    %v246 = vadd.f32 0.0, %v245
    %v247 = vpop.f32.mrf.mxu0
    %248 = vdwg.mxu0
    %249 = vmatpush.bf16.msra.mxu0 0
    %250 = vmatpush.bf16.msra.mxu0 0
    %251 = vmatpush.bf16.msra.mxu0 0
    %252 = vmatpush.bf16.msra.mxu0 0
    %253 = vmatpush.bf16.msra.mxu0 0
    %254 = vmatpush.bf16.msra.mxu0 0
    %255 = vmatpush.bf16.msra.mxu0 0
    %256 = vmatpush.bf16.msra.mxu0 %v163
    %257 = vmatmul.bf16.gmra.mxu0 %v141
    %v258 = vpop.f32.mrf.mxu0
    %v259 = vadd.f32 0.0, %v258
    %v260 = vpop.f32.mrf.mxu0
    %261 = vdwg.mxu0
    %262 = vmatpush.bf16.msra.mxu0 0
    %263 = vmatpush.bf16.msra.mxu0 0
    %264 = vmatpush.bf16.msra.mxu0 0
    %265 = vmatpush.bf16.msra.mxu0 0
    %266 = vmatpush.bf16.msra.mxu0 0
    %267 = vmatpush.bf16.msra.mxu0 0
    %268 = vmatpush.bf16.msra.mxu0 0
    %269 = vmatpush.bf16.msra.mxu0 %v166
    %270 = vmatmul.bf16.gmra.mxu0 %v141
    %v271 = vpop.f32.mrf.mxu0
    %v272 = vadd.f32 0.0, %v271
    %v273 = vpop.f32.mrf.mxu0
    %274 = vdwg.mxu0
    %275 = vmatpush.bf16.msra.mxu0 0
    %276 = vmatpush.bf16.msra.mxu0 0
    %277 = vmatpush.bf16.msra.mxu0 0
    %278 = vmatpush.bf16.msra.mxu0 0
    %279 = vmatpush.bf16.msra.mxu0 0
    %280 = vmatpush.bf16.msra.mxu0 0
    %281 = vmatpush.bf16.msra.mxu0 0
    %282 = vmatpush.bf16.msra.mxu0 %v169
    %283 = vmatmul.bf16.gmra.mxu0 %v141
    %v284 = vpop.f32.mrf.mxu0
    %v285 = vadd.f32 0.0, %v284
    %v286 = vpop.f32.mrf.mxu0
    %287 = vdwg.mxu0
    %v288 = vpack.c.bf16 %v90, %v90
    %v289 = vld [vmem:[#allocation7] sm:$0xff]
    %v290 = vld [vmem:[#allocation7 + $0x8] sm:$0xff]
    %v291 = vld [vmem:[#allocation7 + $0x10] sm:$0xff]
    %v292 = vld [vmem:[#allocation7 + $0x18] sm:$0xff]
    %v293 = vld [vmem:[#allocation7 + $0x20] sm:$0xff]
    %v294 = vld [vmem:[#allocation7 + $0x28] sm:$0xff]
    %v295 = vld [vmem:[#allocation7 + $0x30] sm:$0xff]
    %v296 = vld [vmem:[#allocation7 + $0x38] sm:$0xff]
    %v297 = vld [vmem:[#allocation7 + $0x40] sm:$0xff]
    %v298 = vld [vmem:[#allocation7 + $0x48] sm:$0xff]
    %v299 = vld [vmem:[#allocation7 + $0x50] sm:$0xff]
    %v300 = vld [vmem:[#allocation7 + $0x58] sm:$0xff]
    %v301 = vld [vmem:[#allocation7 + $0x60] sm:$0xff]
    %v302 = vld [vmem:[#allocation7 + $0x68] sm:$0xff]
    %v303 = vld [vmem:[#allocation7 + $0x70] sm:$0xff]
    %v304 = vld [vmem:[#allocation7 + $0x78] sm:$0xff]
    %v305 = vld [vmem:[#allocation7 + $0x80] sm:$0xff]
    %v306 = vld [vmem:[#allocation7 + $0x88] sm:$0xff]
    %v307 = vld [vmem:[#allocation7 + $0x90] sm:$0xff]
    %v308 = vld [vmem:[#allocation7 + $0x98] sm:$0xff]
    %v309 = vld [vmem:[#allocation7 + $0xa0] sm:$0xff]
    %v310 = vld [vmem:[#allocation7 + $0xa8] sm:$0xff]
    %v311 = vld [vmem:[#allocation7 + $0xb0] sm:$0xff]
    %v312 = vld [vmem:[#allocation7 + $0xb8] sm:$0xff]
    %v313 = vld [vmem:[#allocation7 + $0xc0] sm:$0xff]
    %v314 = vld [vmem:[#allocation7 + $0xc8] sm:$0xff]
    %v315 = vld [vmem:[#allocation7 + $0xd0] sm:$0xff]
    %v316 = vld [vmem:[#allocation7 + $0xd8] sm:$0xff]
    %v317 = vld [vmem:[#allocation7 + $0xe0] sm:$0xff]
    %v318 = vld [vmem:[#allocation7 + $0xe8] sm:$0xff]
    %v319 = vld [vmem:[#allocation7 + $0xf0] sm:$0xff]
    %v320 = vld [vmem:[#allocation7 + $0xf8] sm:$0xff]
    %v353 = vunpack.c.l.b16 %v289
    %v354 = vunpack.c.h.b16 %v289
    %v355 = vunpack.c.l.b16 %v290
    %v356 = vunpack.c.h.b16 %v290
    %v357 = vunpack.c.l.b16 %v291
    %v358 = vunpack.c.h.b16 %v291
    %v359 = vunpack.c.l.b16 %v292
    %v360 = vunpack.c.h.b16 %v292
    %v361 = vunpack.c.l.b16 %v293
    %v362 = vunpack.c.h.b16 %v293
    %v363 = vunpack.c.l.b16 %v294
    %v364 = vunpack.c.h.b16 %v294
    %v365 = vunpack.c.l.b16 %v295
    %v366 = vunpack.c.h.b16 %v295
    %v367 = vunpack.c.l.b16 %v296
    %v368 = vunpack.c.h.b16 %v296
    %v369 = vunpack.c.l.b16 %v297
    %v370 = vunpack.c.h.b16 %v297
    %v371 = vunpack.c.l.b16 %v298
    %v372 = vunpack.c.h.b16 %v298
    %v373 = vunpack.c.l.b16 %v299
    %v374 = vunpack.c.h.b16 %v299
    %v375 = vunpack.c.l.b16 %v300
    %v376 = vunpack.c.h.b16 %v300
    %v377 = vunpack.c.l.b16 %v301
    %v378 = vunpack.c.h.b16 %v301
    %v379 = vunpack.c.l.b16 %v302
    %v380 = vunpack.c.h.b16 %v302
    %v381 = vunpack.c.l.b16 %v303
    %v382 = vunpack.c.h.b16 %v303
    %v383 = vunpack.c.l.b16 %v304
    %v384 = vunpack.c.h.b16 %v304
    %v385 = vunpack.c.l.b16 %v305
    %v386 = vunpack.c.h.b16 %v305
    %v387 = vunpack.c.l.b16 %v306
    %v388 = vunpack.c.h.b16 %v306
    %v389 = vunpack.c.l.b16 %v307
    %v390 = vunpack.c.h.b16 %v307
    %v391 = vunpack.c.l.b16 %v308
    %v392 = vunpack.c.h.b16 %v308
    %v393 = vunpack.c.l.b16 %v309
    %v394 = vunpack.c.h.b16 %v309
    %v395 = vunpack.c.l.b16 %v310
    %v396 = vunpack.c.h.b16 %v310
    %v397 = vunpack.c.l.b16 %v311
    %v398 = vunpack.c.h.b16 %v311
    %v399 = vunpack.c.l.b16 %v312
    %v400 = vunpack.c.h.b16 %v312
    %v401 = vunpack.c.l.b16 %v313
    %v402 = vunpack.c.h.b16 %v313
    %v403 = vunpack.c.l.b16 %v314
    %v404 = vunpack.c.h.b16 %v314
    %v405 = vunpack.c.l.b16 %v315
    %v406 = vunpack.c.h.b16 %v315
    %v407 = vunpack.c.l.b16 %v316
    %v408 = vunpack.c.h.b16 %v316
    %v409 = vunpack.c.l.b16 %v317
    %v410 = vunpack.c.h.b16 %v317
    %v411 = vunpack.c.l.b16 %v318
    %v412 = vunpack.c.h.b16 %v318
    %v413 = vunpack.c.l.b16 %v319
    %v414 = vunpack.c.h.b16 %v319
    %v415 = vunpack.c.l.b16 %v320
    %v416 = vunpack.c.h.b16 %v320
    %v417 = vpack.c.b16 %v357, %v353
    %v418 = vpack.c.b16 %v358, %v354
    %v419 = vpack.c.b16 %v359, %v355
    %v420 = vpack.c.b16 %v360, %v356
    %v421 = vpack.c.b16 %v365, %v361
    %v422 = vpack.c.b16 %v366, %v362
    %v423 = vpack.c.b16 %v367, %v363
    %v424 = vpack.c.b16 %v368, %v364
    %v425 = vpack.c.b16 %v373, %v369
    %v426 = vpack.c.b16 %v374, %v370
    %v427 = vpack.c.b16 %v375, %v371
    %v428 = vpack.c.b16 %v376, %v372
    %v429 = vpack.c.b16 %v381, %v377
    %v430 = vpack.c.b16 %v382, %v378
    %v431 = vpack.c.b16 %v383, %v379
    %v432 = vpack.c.b16 %v384, %v380
    %v433 = vpack.c.b16 %v389, %v385
    %v434 = vpack.c.b16 %v390, %v386
    %v435 = vpack.c.b16 %v391, %v387
    %v436 = vpack.c.b16 %v392, %v388
    %v437 = vpack.c.b16 %v397, %v393
    %v438 = vpack.c.b16 %v398, %v394
    %v439 = vpack.c.b16 %v399, %v395
    %v440 = vpack.c.b16 %v400, %v396
    %v441 = vpack.c.b16 %v405, %v401
    %v442 = vpack.c.b16 %v406, %v402
    %v443 = vpack.c.b16 %v407, %v403
    %v444 = vpack.c.b16 %v408, %v404
    %v445 = vpack.c.b16 %v413, %v409
    %v446 = vpack.c.b16 %v414, %v410
    %v447 = vpack.c.b16 %v415, %v411
    %v448 = vpack.c.b16 %v416, %v412
    %481 = vmatpush.bf16.msra.mxu0 %v445
    %482 = vmatpush.bf16.msra.mxu0 %v441
    %483 = vmatpush.bf16.msra.mxu0 %v437
    %484 = vmatpush.bf16.msra.mxu0 %v433
    %485 = vmatpush.bf16.msra.mxu0 %v429
    %486 = vmatpush.bf16.msra.mxu0 %v425
    %487 = vmatpush.bf16.msra.mxu0 %v421
    %488 = vmatpush.bf16.msra.mxu0 %v417
    %489 = vmatmul.bf16.gmra.mxu0 %v288
    %v490 = vpop.f32.mrf.mxu0
    %v491 = vadd.f32 0.0, %v490
    %v492 = vpop.f32.mrf.mxu0
    %493 = vdwg.mxu0
    %494 = vmatpush.bf16.msra.mxu0 %v446
    %495 = vmatpush.bf16.msra.mxu0 %v442
    %496 = vmatpush.bf16.msra.mxu0 %v438
    %497 = vmatpush.bf16.msra.mxu0 %v434
    %498 = vmatpush.bf16.msra.mxu0 %v430
    %499 = vmatpush.bf16.msra.mxu0 %v426
    %500 = vmatpush.bf16.msra.mxu0 %v422
    %501 = vmatpush.bf16.msra.mxu0 %v418
    %502 = vmatmul.bf16.gmra.mxu0 %v288
    %v503 = vpop.f32.mrf.mxu0
    %v504 = vadd.f32 0.0, %v503
    %v505 = vpop.f32.mrf.mxu0
    %506 = vdwg.mxu0
    %507 = vmatpush.bf16.msra.mxu0 %v447
    %508 = vmatpush.bf16.msra.mxu0 %v443
    %509 = vmatpush.bf16.msra.mxu0 %v439
    %510 = vmatpush.bf16.msra.mxu0 %v435
    %511 = vmatpush.bf16.msra.mxu0 %v431
    %512 = vmatpush.bf16.msra.mxu0 %v427
    %513 = vmatpush.bf16.msra.mxu0 %v423
    %514 = vmatpush.bf16.msra.mxu0 %v419
    %515 = vmatmul.bf16.gmra.mxu0 %v288
    %v516 = vpop.f32.mrf.mxu0
    %v517 = vadd.f32 0.0, %v516
    %v518 = vpop.f32.mrf.mxu0
    %519 = vdwg.mxu0
    %520 = vmatpush.bf16.msra.mxu0 %v448
    %521 = vmatpush.bf16.msra.mxu0 %v444
    %522 = vmatpush.bf16.msra.mxu0 %v440
    %523 = vmatpush.bf16.msra.mxu0 %v436
    %524 = vmatpush.bf16.msra.mxu0 %v432
    %525 = vmatpush.bf16.msra.mxu0 %v428
    %526 = vmatpush.bf16.msra.mxu0 %v424
    %527 = vmatpush.bf16.msra.mxu0 %v420
    %528 = vmatmul.bf16.gmra.mxu0 %v288
    %v529 = vpop.f32.mrf.mxu0
    %v530 = vadd.f32 0.0, %v529
    %v531 = vpop.f32.mrf.mxu0
    %532 = vdwg.mxu0
    %v533 = vld [vmem:[%s5] sm:$0x3f]
    %v535 = vperm.slane %v533, 0
    %v536 = vperm.slane %v533, 1
    %v537 = vperm.slane %v533, 2
    %v538 = vperm.slane %v533, 3
    %v539 = vperm.slane %v533, 4
    %v540 = vperm.slane %v533, 5
    %v547 = vadd.f32 %v181, %v535
    %v548 = vadd.f32 %v194, %v536
    %v549 = vadd.f32 %v207, %v537
    %v550 = vadd.f32 %v220, %v538
    %v551 = vadd.f32 %v233, %v539
    %v552 = vadd.f32 %v246, %v540
    %v553 = vxor.u32 %v547, 2147483648
    %v554 = vxor.u32 %v548, 2147483648
    %v555 = vxor.u32 %v549, 2147483648
    %v556 = vxor.u32 %v550, 2147483648
    %v557 = vxor.u32 %v551, 2147483648
    %v558 = vxor.u32 %v552, 2147483648
    %v559 = vmul.f32 %v553, 1.442695
    %v560 = vpow.pop %v559
    %v561 = vmul.f32 %v554, 1.442695
    %v562 = vpow.pop %v561
    %v563 = vmul.f32 %v555, 1.442695
    %v564 = vpow.pop %v563
    %v565 = vmul.f32 %v556, 1.442695
    %v566 = vpow.pop %v565
    %v567 = vmul.f32 %v557, 1.442695
    %v568 = vpow.pop %v567
    %v569 = vmul.f32 %v558, 1.442695
    %v570 = vpow.pop %v569
    %v571 = vadd.f32 %v560, 1.0
    %v572 = vadd.f32 %v562, 1.0
    %v573 = vadd.f32 %v564, 1.0
    %v574 = vadd.f32 %v566, 1.0
    %v575 = vadd.f32 %v568, 1.0
    %v576 = vadd.f32 %v570, 1.0
    %v577 = vrcp.pop %v571
    %v578 = vmul.f32 %v571, %v577
    %v579 = vsub.f32 1.0, %v578
    %v580 = vmul.f32 %v577, %v579
    %v581 = vadd.f32 %v577, %v580
    %vm582 = vweird.f32 %v571
    %vm583 = vweird.f32 %v577
    %vm584 = vmor %vm582, %vm583
    %v585 = vsel %vm584, %v577, %v581
    %v586 = vand.u32 2147483647, %v571
    %vm587 = vcmp.eq.f32.partialorder %v586, 8.507059e+37
    %v588 = vand.u32 %v571, 2147483648
    %v589 = vor.u32 1.1754944e-38, %v588
    %v590 = vsel %vm587, %v589, %v585
    %v591 = vmul.f32 1.0, %v590
    %v592 = vrcp.pop %v572
    %v593 = vmul.f32 %v572, %v592
    %v594 = vsub.f32 1.0, %v593
    %v595 = vmul.f32 %v592, %v594
    %v596 = vadd.f32 %v592, %v595
    %vm597 = vweird.f32 %v572
    %vm598 = vweird.f32 %v592
    %vm599 = vmor %vm597, %vm598
    %v600 = vsel %vm599, %v592, %v596
    %v601 = vand.u32 2147483647, %v572
    %vm602 = vcmp.eq.f32.partialorder %v601, 8.507059e+37
    %v603 = vand.u32 %v572, 2147483648
    %v604 = vor.u32 1.1754944e-38, %v603
    %v605 = vsel %vm602, %v604, %v600
    %v606 = vmul.f32 1.0, %v605
    %v607 = vrcp.pop %v573
    %v608 = vmul.f32 %v573, %v607
    %v609 = vsub.f32 1.0, %v608
    %v610 = vmul.f32 %v607, %v609
    %v611 = vadd.f32 %v607, %v610
    %vm612 = vweird.f32 %v573
    %vm613 = vweird.f32 %v607
    %vm614 = vmor %vm612, %vm613
    %v615 = vsel %vm614, %v607, %v611
    %v616 = vand.u32 2147483647, %v573
    %vm617 = vcmp.eq.f32.partialorder %v616, 8.507059e+37
    %v618 = vand.u32 %v573, 2147483648
    %v619 = vor.u32 1.1754944e-38, %v618
    %v620 = vsel %vm617, %v619, %v615
    %v621 = vmul.f32 1.0, %v620
    %v622 = vrcp.pop %v574
    %v623 = vmul.f32 %v574, %v622
    %v624 = vsub.f32 1.0, %v623
    %v625 = vmul.f32 %v622, %v624
    %v626 = vadd.f32 %v622, %v625
    %vm627 = vweird.f32 %v574
    %vm628 = vweird.f32 %v622
    %vm629 = vmor %vm627, %vm628
    %v630 = vsel %vm629, %v622, %v626
    %v631 = vand.u32 2147483647, %v574
    %vm632 = vcmp.eq.f32.partialorder %v631, 8.507059e+37
    %v633 = vand.u32 %v574, 2147483648
    %v634 = vor.u32 1.1754944e-38, %v633
    %v635 = vsel %vm632, %v634, %v630
    %v636 = vmul.f32 1.0, %v635
    %v637 = vrcp.pop %v575
    %v638 = vmul.f32 %v575, %v637
    %v639 = vsub.f32 1.0, %v638
    %v640 = vmul.f32 %v637, %v639
    %v641 = vadd.f32 %v637, %v640
    %vm642 = vweird.f32 %v575
    %vm643 = vweird.f32 %v637
    %vm644 = vmor %vm642, %vm643
    %v645 = vsel %vm644, %v637, %v641
    %v646 = vand.u32 2147483647, %v575
    %vm647 = vcmp.eq.f32.partialorder %v646, 8.507059e+37
    %v648 = vand.u32 %v575, 2147483648
    %v649 = vor.u32 1.1754944e-38, %v648
    %v650 = vsel %vm647, %v649, %v645
    %v651 = vmul.f32 1.0, %v650
    %v652 = vrcp.pop %v576
    %v653 = vmul.f32 %v576, %v652
    %v654 = vsub.f32 1.0, %v653
    %v655 = vmul.f32 %v652, %v654
    %v656 = vadd.f32 %v652, %v655
    %vm657 = vweird.f32 %v576
    %vm658 = vweird.f32 %v652
    %vm659 = vmor %vm657, %vm658
    %v660 = vsel %vm659, %v652, %v656
    %v661 = vand.u32 2147483647, %v576
    %vm662 = vcmp.eq.f32.partialorder %v661, 8.507059e+37
    %v663 = vand.u32 %v576, 2147483648
    %v664 = vor.u32 1.1754944e-38, %v663
    %v665 = vsel %vm662, %v664, %v660
    %v666 = vmul.f32 1.0, %v665
    %v667 = vld [vmem:[%s6] sm:$0x7]
    %v669 = vperm.slane %v667, 0
    %v670 = vperm.slane %v667, 1
    %v671 = vperm.slane %v667, 2
    %v675 = vadd.f32 %v259, %v669
    %v676 = vadd.f32 %v272, %v670
    %v677 = vadd.f32 %v285, %v671
    %v678 = vld [vmem:[#allocation8] sm:$0x7]
    %v680 = vperm.slane %v678, 0
    %v681 = vperm.slane %v678, 1
    %v682 = vperm.slane %v678, 2
    %v686 = vadd.f32 %v491, %v680
    %v687 = vadd.f32 %v504, %v681
    %v688 = vadd.f32 %v517, %v682
    %v689 = vmul.f32 %v591, %v686
    %v690 = vmul.f32 %v606, %v687
    %v691 = vmul.f32 %v621, %v688
    %v692 = vadd.f32 %v675, %v689
    %v693 = vadd.f32 %v676, %v690
    %v694 = vadd.f32 %v677, %v691
    %v695 = vtanh.pop %v692
    %v696 = vtanh.pop %v693
    %v697 = vtanh.pop %v694
    %v698 = vld [vmem:[%s2] sm:$0xff]
    %v699 = vsub.f32 1.0, %v636
    %v700 = vmul.f32 %v699, %v695
    %v701 = vmul.f32 %v636, %v90
    %v702 = vadd.f32 %v700, %v701
    %v703 = vmul.f32 %v702, %v530
    %704 = vadd.xlane.f32.xlu0 %v703
    %v705 = vpop.xlane.xlu0 %704
    %v706 = vadd.f32 %v705, %v698
    %vm707 = vcmp.gt.f32.partialorder %v706, -inf
    %v708 = vsel %vm707, %v706, -inf
    %v709 = vsel %vm707, 1, 0
    %710 = vset.pattern.permute.xlu0 0
    %711 = vperm.xlu0 %710, %v709
    %v712 = vpop.permute.xlu0 %711
    %vm713 = vcmp.eq.s32.totalorder %v712, 1
    %v714 = vsel %vm713, %v702, 0.0
    %v715 = vsub.f32 1.0, %v651
    %v716 = vmul.f32 %v715, %v696
    %v717 = vmul.f32 %v651, %v90
    %v718 = vadd.f32 %v716, %v717
    %v719 = vmul.f32 %v718, %v530
    %720 = vadd.xlane.f32.xlu0 %v719
    %v721 = vpop.xlane.xlu0 %720
    %v722 = vadd.f32 %v721, %v698
    %724 = vrot.lane.b32.xlu0 %v708, 1
    %v725 = vpop.permute.xlu0 %724
    %vm727 = vcmp.gt.f32.partialorder %v722, %v725
    %v728 = vsel %vm727, %v722, %v725
    %v729 = vsel %vm727, 1, 0
    %730 = vset.pattern.permute.xlu0 1
    %731 = vperm.xlu0 %730, %v729
    %v732 = vpop.permute.xlu0 %731
    %vm733 = vcmp.eq.s32.totalorder %v732, 1
    %v734 = vsel %vm733, %v718, %v714
    %v735 = vsub.f32 1.0, %v666
    %v736 = vmul.f32 %v735, %v697
    %v737 = vmul.f32 %v666, %v90
    %v738 = vadd.f32 %v736, %v737
    %v739 = vmul.f32 %v738, %v530
    %740 = vadd.xlane.f32.xlu0 %v739
    %v741 = vpop.xlane.xlu0 %740
    %v742 = vadd.f32 %v741, %v698
    %744 = vrot.lane.b32.xlu0 %v728, 1
    %v745 = vpop.permute.xlu0 %744
    %vm747 = vcmp.gt.f32.partialorder %v742, %v745
    %748 = vrot.lane.b32.xlu0 %v729, 1
    %v749 = vpop.permute.xlu0 %748
    %v750 = vsel %vm747, 2, %v749
    %v751 = vsel %vm747, 1, 0
    %752 = vset.pattern.permute.xlu0 2
    %753 = vperm.xlu0 %752, %v751
    %v754 = vpop.permute.xlu0 %753
    %vm755 = vcmp.eq.s32.totalorder %v754, 1
    %v756 = vsel %vm755, %v738, %v734
    %v757 = vlaneseq
    %v758 = vand.u32 %v757, 127
    %v759 = vadd.s32 %v750, 8
    %760 = vset.pattern.permute.xlu0 2
    %761 = vperm.xlu0 %760, %v759
    %v762 = vpop.permute.xlu0 %761
    %vm763 = vcmp.eq.s32.totalorder %v758, %v762
    %v764 = vsel %vm763, 1, 0
    %v765 = vcvt.s32.f32 %v764
    %v766 = vadd.f32 %v756, %v765
    %767 = vst [vmem:[#allocation10] sm:$0xff] %v766
    // Predicated region
    $region50: #{tpu_custom_call.1} parent=1 // pred_check
      _
    $region51: #{tpu_custom_call.1} parent=1 // pred_check_branch
      %769 = sbr.rel (0) target = $region53
    $region52: #{tpu_custom_call.1} parent=1 // pred_region
      %771 = vsyncadd [#allocation4], 0
      %s773 = sshll.u32 [#allocation10], 4
      %s774 = int_to_ptr.vmem [resolvable:$true] %s773
      %s775 = sshll.u32 %s8, 4
      %s776 = int_to_ptr.hbm [resolvable:$true] %s775
      %778 = dma.vmem_to_hbm [thread:$0]  %s774, 128, %s776, [#allocation4]
    $region53: #{tpu_custom_call.1} parent=1 // pred_fallthru
      _
    // Predicated region
    $region54: #{tpu_custom_call.1} parent=1 // pred_check
      _
    $region55: #{tpu_custom_call.1} parent=1 // pred_check_branch
      %780 = sbr.rel (0) target = $region57
    $region56: #{tpu_custom_call.1} parent=1 // pred_region
      %782 = dma.done [#allocation4], 128
    $region57: #{tpu_custom_call.1} parent=1 // pred_fallthru
      _
    %783 = vsyncpa [#allocation3], 1
    %784 = vsyncpa [#allocation6], 1
    %785 = vsyncpa [#allocation9], 1
    %786 = vsyncpa [#allocation4], 1

// kernel: tpu_custom_call.1
$region0: #{tpu_custom_call.1}
  #allocation0 [shape = 'u32[]', space=smem, size = 0x4, offset = 0x4, fixed_abs, tag = 'smem constant byte address 0x4 - core index']
  #allocation1 [shape = 'u32[72,128]{1,0:T(1,128)}', space=vmem, size = 0x9000, scoped, tag = 'internal scratch']
  %s0 = inlined_call_operand.hbm [shape: bf16[8,12], index: 0, kind: input, shape index: {}]
  %s1 = inlined_call_operand.vmem [shape: f32[8,128], index: 1, kind: input, shape index: {}]
  %s2 = inlined_call_operand.vmem [shape: f32[8,3], index: 2, kind: input, shape index: {}]
  %s3 = inlined_call_operand.hbm [shape: bf16[12,1152], index: 3, kind: input, shape index: {}]
  %s4 = inlined_call_operand.hbm [shape: bf16[128,512], index: 4, kind: input, shape index: {}]
  %s5 = inlined_call_operand.vmem [shape: f32[1,768], index: 5, kind: input, shape index: {}]
  %s6 = inlined_call_operand.vmem [shape: f32[1,384], index: 6, kind: input, shape index: {}]
  %s7 = inlined_call_operand.hbm [shape: f32[1,384], index: 7, kind: input, shape index: {}]
  %s8 = inlined_call_operand.hbm [shape: f32[8,128], index: 8, kind: output, shape index: {}]
  %s9 = sld [smem:[#allocation0]]
  $region58: #{tpu_custom_call.1} parent=0
    _
  %s11 = ssub.s32 1, %s9
  %s12 = scalar_select 0, %s11, %s9
  $region1: #{tpu_custom_call.1} parent=0
    #allocation2 [shape = 'u8[2048]{0}', space=vmem, size = 0x800, scoped, tag = 'input window, operand 0, single buffered']
    #allocation3 [shape = 's32[1]{0}', space=sflag, size = 0x4, scoped, tag = 'scoped memory for tpu_custom_call.1']
    #allocation4 [shape = 's32[1]{0}', space=sflag, size = 0x4, scoped, tag = 'scoped memory for tpu_custom_call.1']
    #allocation5 [shape = 'u8[36864]{0}', space=vmem, size = 0x9000, scoped, tag = 'input window, operand 3, single buffered']
    #allocation6 [shape = 's32[1]{0}', space=sflag, size = 0x4, scoped, tag = 'scoped memory for tpu_custom_call.1']
    #allocation7 [shape = 'u8[131072]{0}', space=vmem, size = 0x20000, scoped, tag = 'input window, operand 4, single buffered']
    #allocation8 [shape = 'u8[1536]{0}', space=vmem, size = 0x800, scoped, tag = 'input window, operand 7, single buffered']
    #allocation9 [shape = 's32[1]{0}', space=sflag, size = 0x4, scoped, tag = 'scoped memory for tpu_custom_call.1']
    #allocation10 [shape = 'u8[4096]{0}', space=vmem, size = 0x1000, scoped, tag = 'output window, operand 0, single buffered']
    %13 = vsyncpa [#allocation3], 0
    %14 = vsyncpa [#allocation6], 0
    %15 = vsyncpa [#allocation9], 0
    %16 = vsyncpa [#allocation4], 0
    // Predicated region
    $region2: #{tpu_custom_call.1} parent=1 // pred_check
      _
    $region3: #{tpu_custom_call.1} parent=1 // pred_check_branch
      %18 = sbr.rel (0) target = $region5
    $region4: #{tpu_custom_call.1} parent=1 // pred_region
      %20 = vsyncadd [#allocation3], 0
      %s22 = sshll.u32 %s0, 4
      %s23 = int_to_ptr.hbm [resolvable:$true] %s22
      %s24 = sshll.u32 [#allocation2], 4
      %s25 = int_to_ptr.vmem [resolvable:$true] %s24
      %27 = dma.hbm_to_vmem [thread:$0]  %s23, 64, %s25, [#allocation3]
    $region5: #{tpu_custom_call.1} parent=1 // pred_fallthru
      _
    // Predicated region
    $region6: #{tpu_custom_call.1} parent=1 // pred_check
      _
    $region7: #{tpu_custom_call.1} parent=1 // pred_check_branch
      %29 = sbr.rel (0) target = $region9
    $region8: #{tpu_custom_call.1} parent=1 // pred_region
      _
    $region9: #{tpu_custom_call.1} parent=1 // pred_fallthru
      _
    // Predicated region
    $region10: #{tpu_custom_call.1} parent=1 // pred_check
      _
    $region11: #{tpu_custom_call.1} parent=1 // pred_check_branch
      %31 = sbr.rel (0) target = $region13
    $region12: #{tpu_custom_call.1} parent=1 // pred_region
      _
    $region13: #{tpu_custom_call.1} parent=1 // pred_fallthru
      _
    // Predicated region
    $region14: #{tpu_custom_call.1} parent=1 // pred_check
      _
    $region15: #{tpu_custom_call.1} parent=1 // pred_check_branch
      %33 = sbr.rel (0) target = $region17
    $region16: #{tpu_custom_call.1} parent=1 // pred_region
      %35 = vsyncadd [#allocation6], 0
      %s36 = sshll.u32 %s3, 4
      %s37 = int_to_ptr.hbm [resolvable:$true] %s36
      %s38 = sshll.u32 [#allocation5], 4
      %s39 = int_to_ptr.vmem [resolvable:$true] %s38
      %44 = dma.hbm_to_vmem [thread:$0]  %s37, 1152, %s39, [#allocation6], 576, 576, 36
    $region17: #{tpu_custom_call.1} parent=1 // pred_fallthru
      _
    // Predicated region
    $region18: #{tpu_custom_call.1} parent=1 // pred_check
      _
    $region19: #{tpu_custom_call.1} parent=1 // pred_check_branch
      %46 = sbr.rel (0) target = $region21
    $region20: #{tpu_custom_call.1} parent=1 // pred_region
      %48 = vsyncadd [#allocation6], 0
      %s49 = sshll.u32 %s4, 4
      %s50 = int_to_ptr.hbm [resolvable:$true] %s49
      %s51 = sshll.u32 [#allocation7], 4
      %s52 = int_to_ptr.vmem [resolvable:$true] %s51
      %57 = dma.hbm_to_vmem [thread:$0]  %s50, 4096, %s52, [#allocation6], 256, 256, 16
    $region21: #{tpu_custom_call.1} parent=1 // pred_fallthru
      _
    // Predicated region
    $region22: #{tpu_custom_call.1} parent=1 // pred_check
      _
    $region23: #{tpu_custom_call.1} parent=1 // pred_check_branch
      %59 = sbr.rel (0) target = $region25
    $region24: #{tpu_custom_call.1} parent=1 // pred_region
      _
    $region25: #{tpu_custom_call.1} parent=1 // pred_fallthru
      _
    // Predicated region
    $region26: #{tpu_custom_call.1} parent=1 // pred_check
      _
    $region27: #{tpu_custom_call.1} parent=1 // pred_check_branch
      %61 = sbr.rel (0) target = $region29
    $region28: #{tpu_custom_call.1} parent=1 // pred_region
      _
    $region29: #{tpu_custom_call.1} parent=1 // pred_fallthru
      _
    // Predicated region
    $region30: #{tpu_custom_call.1} parent=1 // pred_check
      _
    $region31: #{tpu_custom_call.1} parent=1 // pred_check_branch
      %63 = sbr.rel (0) target = $region33
    $region32: #{tpu_custom_call.1} parent=1 // pred_region
      %65 = vsyncadd [#allocation9], 0
      %s67 = sshll.u32 %s7, 4
      %s68 = int_to_ptr.hbm [resolvable:$true] %s67
      %s69 = sshll.u32 [#allocation8], 4
      %s70 = int_to_ptr.vmem [resolvable:$true] %s69
      %72 = dma.hbm_to_vmem [thread:$0]  %s68, 48, %s70, [#allocation9]
    $region33: #{tpu_custom_call.1} parent=1 // pred_fallthru
      _
    // Predicated region
    $region34: #{tpu_custom_call.1} parent=1 // pred_check
      _
    $region35: #{tpu_custom_call.1} parent=1 // pred_check_branch
      %74 = sbr.rel (0) target = $region37
    $region36: #{tpu_custom_call.1} parent=1 // pred_region
      %76 = dma.done [#allocation3], 64
    $region37: #{tpu_custom_call.1} parent=1 // pred_fallthru
      _
    // Predicated region
    $region38: #{tpu_custom_call.1} parent=1 // pred_check
      _
    $region39: #{tpu_custom_call.1} parent=1 // pred_check_branch
      %78 = sbr.rel (0) target = $region41
    $region40: #{tpu_custom_call.1} parent=1 // pred_region
      %80 = dma.done [#allocation6], 1152
    $region41: #{tpu_custom_call.1} parent=1 // pred_fallthru
      _
    // Predicated region
    $region42: #{tpu_custom_call.1} parent=1 // pred_check
      _
    $region43: #{tpu_custom_call.1} parent=1 // pred_check_branch
      %82 = sbr.rel (0) target = $region45
    $region44: #{tpu_custom_call.1} parent=1 // pred_region
      %84 = dma.done [#allocation6], 4096
    $region45: #{tpu_custom_call.1} parent=1 // pred_fallthru
      _
    // Predicated region
    $region46: #{tpu_custom_call.1} parent=1 // pred_check
      _
    $region47: #{tpu_custom_call.1} parent=1 // pred_check_branch
      %86 = sbr.rel (0) target = $region49
    $region48: #{tpu_custom_call.1} parent=1 // pred_region
      %88 = dma.done [#allocation9], 48
    $region49: #{tpu_custom_call.1} parent=1 // pred_fallthru
      _
    %v90 = vld [vmem:[%s1] sm:$0xff]
    %v91 = vld [vmem:[#allocation2] sm:$0xf]
    %v92 = vld [vmem:[#allocation5] sm:$0xff]
    %v93 = vld [vmem:[#allocation5 + $0x8] sm:$0xff]
    %v94 = vld [vmem:[#allocation5 + $0x10] sm:$0xff]
    %v95 = vld [vmem:[#allocation5 + $0x18] sm:$0xff]
    %v96 = vld [vmem:[#allocation5 + $0x20] sm:$0xf]
    %v97 = vld [vmem:[#allocation5 + $0x24] sm:$0x33]
    %v98 = vld [vmem:[#allocation5 + $0x2c] sm:$0x33]
    %v99 = vld [vmem:[#allocation5 + $0x34] sm:$0x33]
    %v100 = vld [vmem:[#allocation5 + $0x3c] sm:$0x33]
    %v101 = vld [vmem:[#allocation5 + $0x44] sm:$0x3]
    %v112 = vunpack.c.l.b16 %v92
    %v113 = vunpack.c.h.b16 %v92
    %v114 = vunpack.c.l.b16 %v93
    %v115 = vunpack.c.h.b16 %v93
    %v116 = vunpack.c.l.b16 %v94
    %v117 = vunpack.c.h.b16 %v94
    %v118 = vunpack.c.l.b16 %v95
    %v119 = vunpack.c.h.b16 %v95
    %v120 = vunpack.c.l.b16 %v96
    %v121 = vunpack.c.l.b16 %v97
    %v122 = vunpack.c.h.b16 %v97
    %v123 = vunpack.c.l.b16 %v98
    %v124 = vunpack.c.h.b16 %v98
    %v125 = vunpack.c.l.b16 %v99
    %v126 = vunpack.c.h.b16 %v99
    %v127 = vunpack.c.l.b16 %v100
    %v128 = vunpack.c.h.b16 %v100
    %v129 = vunpack.c.l.b16 %v101
    %v130 = vpack.c.b16 %v121, %v112
    %v131 = vpack.c.b16 %v122, %v113
    %v132 = vpack.c.b16 %v123, %v114
    %v133 = vpack.c.b16 %v124, %v115
    %v134 = vpack.c.b16 %v125, %v116
    %v135 = vpack.c.b16 %v126, %v117
    %v136 = vpack.c.b16 %v127, %v118
    %v137 = vpack.c.b16 %v128, %v119
    %v138 = vpack.c.b16 %v129, %v120
    %vm139 = vcmask 97280
    %v141 = vsel %vm139, %v91, 0
    %vm143 = vcmask 1045504
    %v145 = vsel %vm143, %v130, 0
    %v148 = vsel %vm143, %v131, 0
    %v151 = vsel %vm143, %v132, 0
    %v154 = vsel %vm143, %v133, 0
    %v157 = vsel %vm143, %v134, 0
    %v160 = vsel %vm143, %v135, 0
    %v163 = vsel %vm143, %v136, 0
    %v166 = vsel %vm143, %v137, 0
    %v169 = vsel %vm143, %v138, 0
    %171 = vmatpush.bf16.msra.mxu0 0
    %172 = vmatpush.bf16.msra.mxu0 0
    %173 = vmatpush.bf16.msra.mxu0 0
    %174 = vmatpush.bf16.msra.mxu0 0
    %175 = vmatpush.bf16.msra.mxu0 0
    %176 = vmatpush.bf16.msra.mxu0 0
    %177 = vmatpush.bf16.msra.mxu0 0
    %178 = vmatpush.bf16.msra.mxu0 %v145
    %179 = vmatmul.bf16.gmra.mxu0 %v141
    %v180 = vpop.f32.mrf.mxu0
    %v181 = vadd.f32 0.0, %v180
    %v182 = vpop.f32.mrf.mxu0
    %183 = vdwg.mxu0
    %184 = vmatpush.bf16.msra.mxu0 0
    %185 = vmatpush.bf16.msra.mxu0 0
    %186 = vmatpush.bf16.msra.mxu0 0
    %187 = vmatpush.bf16.msra.mxu0 0
    %188 = vmatpush.bf16.msra.mxu0 0
    %189 = vmatpush.bf16.msra.mxu0 0
    %190 = vmatpush.bf16.msra.mxu0 0
    %191 = vmatpush.bf16.msra.mxu0 %v148
    %192 = vmatmul.bf16.gmra.mxu0 %v141
    %v193 = vpop.f32.mrf.mxu0
    %v194 = vadd.f32 0.0, %v193
    %v195 = vpop.f32.mrf.mxu0
    %196 = vdwg.mxu0
    %197 = vmatpush.bf16.msra.mxu0 0
    %198 = vmatpush.bf16.msra.mxu0 0
    %199 = vmatpush.bf16.msra.mxu0 0
    %200 = vmatpush.bf16.msra.mxu0 0
    %201 = vmatpush.bf16.msra.mxu0 0
    %202 = vmatpush.bf16.msra.mxu0 0
    %203 = vmatpush.bf16.msra.mxu0 0
    %204 = vmatpush.bf16.msra.mxu0 %v151
    %205 = vmatmul.bf16.gmra.mxu0 %v141
    %v206 = vpop.f32.mrf.mxu0
    %v207 = vadd.f32 0.0, %v206
    %v208 = vpop.f32.mrf.mxu0
    %209 = vdwg.mxu0
    %210 = vmatpush.bf16.msra.mxu0 0
    %211 = vmatpush.bf16.msra.mxu0 0
    %212 = vmatpush.bf16.msra.mxu0 0
    %213 = vmatpush.bf16.msra.mxu0 0
    %214 = vmatpush.bf16.msra.mxu0 0
    %215 = vmatpush.bf16.msra.mxu0 0
    %216 = vmatpush.bf16.msra.mxu0 0
    %217 = vmatpush.bf16.msra.mxu0 %v154
    %218 = vmatmul.bf16.gmra.mxu0 %v141
    %v219 = vpop.f32.mrf.mxu0
    %v220 = vadd.f32 0.0, %v219
    %v221 = vpop.f32.mrf.mxu0
    %222 = vdwg.mxu0
    %223 = vmatpush.bf16.msra.mxu0 0
    %224 = vmatpush.bf16.msra.mxu0 0
    %225 = vmatpush.bf16.msra.mxu0 0
    %226 = vmatpush.bf16.msra.mxu0 0
    %227 = vmatpush.bf16.msra.mxu0 0
    %228 = vmatpush.bf16.msra.mxu0 0
    %229 = vmatpush.bf16.msra.mxu0 0
    %230 = vmatpush.bf16.msra.mxu0 %v157
    %231 = vmatmul.bf16.gmra.mxu0 %v141
    %v232 = vpop.f32.mrf.mxu0
    %v233 = vadd.f32 0.0, %v232
    %v234 = vpop.f32.mrf.mxu0
    %235 = vdwg.mxu0
    %236 = vmatpush.bf16.msra.mxu0 0
    %237 = vmatpush.bf16.msra.mxu0 0
    %238 = vmatpush.bf16.msra.mxu0 0
    %239 = vmatpush.bf16.msra.mxu0 0
    %240 = vmatpush.bf16.msra.mxu0 0
    %241 = vmatpush.bf16.msra.mxu0 0
    %242 = vmatpush.bf16.msra.mxu0 0
    %243 = vmatpush.bf16.msra.mxu0 %v160
    %244 = vmatmul.bf16.gmra.mxu0 %v141
    %v245 = vpop.f32.mrf.mxu0
    %v246 = vadd.f32 0.0, %v245
    %v247 = vpop.f32.mrf.mxu0
    %248 = vdwg.mxu0
    %249 = vmatpush.bf16.msra.mxu0 0
    %250 = vmatpush.bf16.msra.mxu0 0
    %251 = vmatpush.bf16.msra.mxu0 0
    %252 = vmatpush.bf16.msra.mxu0 0
    %253 = vmatpush.bf16.msra.mxu0 0
    %254 = vmatpush.bf16.msra.mxu0 0
    %255 = vmatpush.bf16.msra.mxu0 0
    %256 = vmatpush.bf16.msra.mxu0 %v163
    %257 = vmatmul.bf16.gmra.mxu0 %v141
    %v258 = vpop.f32.mrf.mxu0
    %v259 = vadd.f32 0.0, %v258
    %v260 = vpop.f32.mrf.mxu0
    %261 = vdwg.mxu0
    %262 = vmatpush.bf16.msra.mxu0 0
    %263 = vmatpush.bf16.msra.mxu0 0
    %264 = vmatpush.bf16.msra.mxu0 0
    %265 = vmatpush.bf16.msra.mxu0 0
    %266 = vmatpush.bf16.msra.mxu0 0
    %267 = vmatpush.bf16.msra.mxu0 0
    %268 = vmatpush.bf16.msra.mxu0 0
    %269 = vmatpush.bf16.msra.mxu0 %v166
    %270 = vmatmul.bf16.gmra.mxu0 %v141
    %v271 = vpop.f32.mrf.mxu0
    %v272 = vadd.f32 0.0, %v271
    %v273 = vpop.f32.mrf.mxu0
    %274 = vdwg.mxu0
    %275 = vmatpush.bf16.msra.mxu0 0
    %276 = vmatpush.bf16.msra.mxu0 0
    %277 = vmatpush.bf16.msra.mxu0 0
    %278 = vmatpush.bf16.msra.mxu0 0
    %279 = vmatpush.bf16.msra.mxu0 0
    %280 = vmatpush.bf16.msra.mxu0 0
    %281 = vmatpush.bf16.msra.mxu0 0
    %282 = vmatpush.bf16.msra.mxu0 %v169
    %283 = vmatmul.bf16.gmra.mxu0 %v141
    %v284 = vpop.f32.mrf.mxu0
    %v285 = vadd.f32 0.0, %v284
    %v286 = vpop.f32.mrf.mxu0
    %287 = vdwg.mxu0
    %v288 = vpack.c.bf16 %v90, %v90
    %v289 = vld [vmem:[#allocation7] sm:$0xff]
    %v290 = vld [vmem:[#allocation7 + $0x8] sm:$0xff]
    %v291 = vld [vmem:[#allocation7 + $0x10] sm:$0xff]
    %v292 = vld [vmem:[#allocation7 + $0x18] sm:$0xff]
    %v293 = vld [vmem:[#allocation7 + $0x20] sm:$0xff]
    %v294 = vld [vmem:[#allocation7 + $0x28] sm:$0xff]
    %v295 = vld [vmem:[#allocation7 + $0x30] sm:$0xff]
    %v296 = vld [vmem:[#allocation7 + $0x38] sm:$0xff]
    %v297 = vld [vmem:[#allocation7 + $0x40] sm:$0xff]
    %v298 = vld [vmem:[#allocation7 + $0x48] sm:$0xff]
    %v299 = vld [vmem:[#allocation7 + $0x50] sm:$0xff]
    %v300 = vld [vmem:[#allocation7 + $0x58] sm:$0xff]
    %v301 = vld [vmem:[#allocation7 + $0x60] sm:$0xff]
    %v302 = vld [vmem:[#allocation7 + $0x68] sm:$0xff]
    %v303 = vld [vmem:[#allocation7 + $0x70] sm:$0xff]
    %v304 = vld [vmem:[#allocation7 + $0x78] sm:$0xff]
    %v305 = vld [vmem:[#allocation7 + $0x80] sm:$0xff]
    %v306 = vld [vmem:[#allocation7 + $0x88] sm:$0xff]
    %v307 = vld [vmem:[#allocation7 + $0x90] sm:$0xff]
    %v308 = vld [vmem:[#allocation7 + $0x98] sm:$0xff]
    %v309 = vld [vmem:[#allocation7 + $0xa0] sm:$0xff]
    %v310 = vld [vmem:[#allocation7 + $0xa8] sm:$0xff]
    %v311 = vld [vmem:[#allocation7 + $0xb0] sm:$0xff]
    %v312 = vld [vmem:[#allocation7 + $0xb8] sm:$0xff]
    %v313 = vld [vmem:[#allocation7 + $0xc0] sm:$0xff]
    %v314 = vld [vmem:[#allocation7 + $0xc8] sm:$0xff]
    %v315 = vld [vmem:[#allocation7 + $0xd0] sm:$0xff]
    %v316 = vld [vmem:[#allocation7 + $0xd8] sm:$0xff]
    %v317 = vld [vmem:[#allocation7 + $0xe0] sm:$0xff]
    %v318 = vld [vmem:[#allocation7 + $0xe8] sm:$0xff]
    %v319 = vld [vmem:[#allocation7 + $0xf0] sm:$0xff]
    %v320 = vld [vmem:[#allocation7 + $0xf8] sm:$0xff]
    %v353 = vunpack.c.l.b16 %v289
    %v354 = vunpack.c.h.b16 %v289
    %v355 = vunpack.c.l.b16 %v290
    %v356 = vunpack.c.h.b16 %v290
    %v357 = vunpack.c.l.b16 %v291
    %v358 = vunpack.c.h.b16 %v291
    %v359 = vunpack.c.l.b16 %v292
    %v360 = vunpack.c.h.b16 %v292
    %v361 = vunpack.c.l.b16 %v293
    %v362 = vunpack.c.h.b16 %v293
    %v363 = vunpack.c.l.b16 %v294
    %v364 = vunpack.c.h.b16 %v294
    %v365 = vunpack.c.l.b16 %v295
    %v366 = vunpack.c.h.b16 %v295
    %v367 = vunpack.c.l.b16 %v296
    %v368 = vunpack.c.h.b16 %v296
    %v369 = vunpack.c.l.b16 %v297
    %v370 = vunpack.c.h.b16 %v297
    %v371 = vunpack.c.l.b16 %v298
    %v372 = vunpack.c.h.b16 %v298
    %v373 = vunpack.c.l.b16 %v299
    %v374 = vunpack.c.h.b16 %v299
    %v375 = vunpack.c.l.b16 %v300
    %v376 = vunpack.c.h.b16 %v300
    %v377 = vunpack.c.l.b16 %v301
    %v378 = vunpack.c.h.b16 %v301
    %v379 = vunpack.c.l.b16 %v302
    %v380 = vunpack.c.h.b16 %v302
    %v381 = vunpack.c.l.b16 %v303
    %v382 = vunpack.c.h.b16 %v303
    %v383 = vunpack.c.l.b16 %v304
    %v384 = vunpack.c.h.b16 %v304
    %v385 = vunpack.c.l.b16 %v305
    %v386 = vunpack.c.h.b16 %v305
    %v387 = vunpack.c.l.b16 %v306
    %v388 = vunpack.c.h.b16 %v306
    %v389 = vunpack.c.l.b16 %v307
    %v390 = vunpack.c.h.b16 %v307
    %v391 = vunpack.c.l.b16 %v308
    %v392 = vunpack.c.h.b16 %v308
    %v393 = vunpack.c.l.b16 %v309
    %v394 = vunpack.c.h.b16 %v309
    %v395 = vunpack.c.l.b16 %v310
    %v396 = vunpack.c.h.b16 %v310
    %v397 = vunpack.c.l.b16 %v311
    %v398 = vunpack.c.h.b16 %v311
    %v399 = vunpack.c.l.b16 %v312
    %v400 = vunpack.c.h.b16 %v312
    %v401 = vunpack.c.l.b16 %v313
    %v402 = vunpack.c.h.b16 %v313
    %v403 = vunpack.c.l.b16 %v314
    %v404 = vunpack.c.h.b16 %v314
    %v405 = vunpack.c.l.b16 %v315
    %v406 = vunpack.c.h.b16 %v315
    %v407 = vunpack.c.l.b16 %v316
    %v408 = vunpack.c.h.b16 %v316
    %v409 = vunpack.c.l.b16 %v317
    %v410 = vunpack.c.h.b16 %v317
    %v411 = vunpack.c.l.b16 %v318
    %v412 = vunpack.c.h.b16 %v318
    %v413 = vunpack.c.l.b16 %v319
    %v414 = vunpack.c.h.b16 %v319
    %v415 = vunpack.c.l.b16 %v320
    %v416 = vunpack.c.h.b16 %v320
    %v417 = vpack.c.b16 %v357, %v353
    %v418 = vpack.c.b16 %v358, %v354
    %v419 = vpack.c.b16 %v359, %v355
    %v420 = vpack.c.b16 %v360, %v356
    %v421 = vpack.c.b16 %v365, %v361
    %v422 = vpack.c.b16 %v366, %v362
    %v423 = vpack.c.b16 %v367, %v363
    %v424 = vpack.c.b16 %v368, %v364
    %v425 = vpack.c.b16 %v373, %v369
    %v426 = vpack.c.b16 %v374, %v370
    %v427 = vpack.c.b16 %v375, %v371
    %v428 = vpack.c.b16 %v376, %v372
    %v429 = vpack.c.b16 %v381, %v377
    %v430 = vpack.c.b16 %v382, %v378
    %v431 = vpack.c.b16 %v383, %v379
    %v432 = vpack.c.b16 %v384, %v380
    %v433 = vpack.c.b16 %v389, %v385
    %v434 = vpack.c.b16 %v390, %v386
    %v435 = vpack.c.b16 %v391, %v387
    %v436 = vpack.c.b16 %v392, %v388
    %v437 = vpack.c.b16 %v397, %v393
    %v438 = vpack.c.b16 %v398, %v394
    %v439 = vpack.c.b16 %v399, %v395
    %v440 = vpack.c.b16 %v400, %v396
    %v441 = vpack.c.b16 %v405, %v401
    %v442 = vpack.c.b16 %v406, %v402
    %v443 = vpack.c.b16 %v407, %v403
    %v444 = vpack.c.b16 %v408, %v404
    %v445 = vpack.c.b16 %v413, %v409
    %v446 = vpack.c.b16 %v414, %v410
    %v447 = vpack.c.b16 %v415, %v411
    %v448 = vpack.c.b16 %v416, %v412
    %481 = vmatpush.bf16.msra.mxu0 %v445
    %482 = vmatpush.bf16.msra.mxu0 %v441
    %483 = vmatpush.bf16.msra.mxu0 %v437
    %484 = vmatpush.bf16.msra.mxu0 %v433
    %485 = vmatpush.bf16.msra.mxu0 %v429
    %486 = vmatpush.bf16.msra.mxu0 %v425
    %487 = vmatpush.bf16.msra.mxu0 %v421
    %488 = vmatpush.bf16.msra.mxu0 %v417
    %489 = vmatmul.bf16.gmra.mxu0 %v288
    %v490 = vpop.f32.mrf.mxu0
    %v491 = vadd.f32 0.0, %v490
    %v492 = vpop.f32.mrf.mxu0
    %493 = vdwg.mxu0
    %494 = vmatpush.bf16.msra.mxu0 %v446
    %495 = vmatpush.bf16.msra.mxu0 %v442
    %496 = vmatpush.bf16.msra.mxu0 %v438
    %497 = vmatpush.bf16.msra.mxu0 %v434
    %498 = vmatpush.bf16.msra.mxu0 %v430
    %499 = vmatpush.bf16.msra.mxu0 %v426
    %500 = vmatpush.bf16.msra.mxu0 %v422
    %501 = vmatpush.bf16.msra.mxu0 %v418
    %502 = vmatmul.bf16.gmra.mxu0 %v288
    %v503 = vpop.f32.mrf.mxu0
    %v504 = vadd.f32 0.0, %v503
    %v505 = vpop.f32.mrf.mxu0
    %506 = vdwg.mxu0
    %507 = vmatpush.bf16.msra.mxu0 %v447
    %508 = vmatpush.bf16.msra.mxu0 %v443
    %509 = vmatpush.bf16.msra.mxu0 %v439
    %510 = vmatpush.bf16.msra.mxu0 %v435
    %511 = vmatpush.bf16.msra.mxu0 %v431
    %512 = vmatpush.bf16.msra.mxu0 %v427
    %513 = vmatpush.bf16.msra.mxu0 %v423
    %514 = vmatpush.bf16.msra.mxu0 %v419
    %515 = vmatmul.bf16.gmra.mxu0 %v288
    %v516 = vpop.f32.mrf.mxu0
    %v517 = vadd.f32 0.0, %v516
    %v518 = vpop.f32.mrf.mxu0
    %519 = vdwg.mxu0
    %520 = vmatpush.bf16.msra.mxu0 %v448
    %521 = vmatpush.bf16.msra.mxu0 %v444
    %522 = vmatpush.bf16.msra.mxu0 %v440
    %523 = vmatpush.bf16.msra.mxu0 %v436
    %524 = vmatpush.bf16.msra.mxu0 %v432
    %525 = vmatpush.bf16.msra.mxu0 %v428
    %526 = vmatpush.bf16.msra.mxu0 %v424
    %527 = vmatpush.bf16.msra.mxu0 %v420
    %528 = vmatmul.bf16.gmra.mxu0 %v288
    %v529 = vpop.f32.mrf.mxu0
    %v530 = vadd.f32 0.0, %v529
    %v531 = vpop.f32.mrf.mxu0
    %532 = vdwg.mxu0
    %v533 = vld [vmem:[%s5] sm:$0x3f]
    %v535 = vperm.slane %v533, 0
    %v536 = vperm.slane %v533, 1
    %v537 = vperm.slane %v533, 2
    %v538 = vperm.slane %v533, 3
    %v539 = vperm.slane %v533, 4
    %v540 = vperm.slane %v533, 5
    %v547 = vadd.f32 %v181, %v535
    %v548 = vadd.f32 %v194, %v536
    %v549 = vadd.f32 %v207, %v537
    %v550 = vadd.f32 %v220, %v538
    %v551 = vadd.f32 %v233, %v539
    %v552 = vadd.f32 %v246, %v540
    %v553 = vxor.u32 %v547, 2147483648
    %v554 = vxor.u32 %v548, 2147483648
    %v555 = vxor.u32 %v549, 2147483648
    %v556 = vxor.u32 %v550, 2147483648
    %v557 = vxor.u32 %v551, 2147483648
    %v558 = vxor.u32 %v552, 2147483648
    %v559 = vmul.f32 %v553, 1.442695
    %v560 = vpow.pop %v559
    %v561 = vmul.f32 %v554, 1.442695
    %v562 = vpow.pop %v561
    %v563 = vmul.f32 %v555, 1.442695
    %v564 = vpow.pop %v563
    %v565 = vmul.f32 %v556, 1.442695
    %v566 = vpow.pop %v565
    %v567 = vmul.f32 %v557, 1.442695
    %v568 = vpow.pop %v567
    %v569 = vmul.f32 %v558, 1.442695
    %v570 = vpow.pop %v569
    %v571 = vadd.f32 %v560, 1.0
    %v572 = vadd.f32 %v562, 1.0
    %v573 = vadd.f32 %v564, 1.0
    %v574 = vadd.f32 %v566, 1.0
    %v575 = vadd.f32 %v568, 1.0
    %v576 = vadd.f32 %v570, 1.0
    %v577 = vrcp.pop %v571
    %v578 = vmul.f32 %v571, %v577
    %v579 = vsub.f32 1.0, %v578
    %v580 = vmul.f32 %v577, %v579
    %v581 = vadd.f32 %v577, %v580
    %vm582 = vweird.f32 %v571
    %vm583 = vweird.f32 %v577
    %vm584 = vmor %vm582, %vm583
    %v585 = vsel %vm584, %v577, %v581
    %v586 = vand.u32 2147483647, %v571
    %vm587 = vcmp.eq.f32.partialorder %v586, 8.507059e+37
    %v588 = vand.u32 %v571, 2147483648
    %v589 = vor.u32 1.1754944e-38, %v588
    %v590 = vsel %vm587, %v589, %v585
    %v591 = vmul.f32 1.0, %v590
    %v592 = vrcp.pop %v572
    %v593 = vmul.f32 %v572, %v592
    %v594 = vsub.f32 1.0, %v593
    %v595 = vmul.f32 %v592, %v594
    %v596 = vadd.f32 %v592, %v595
    %vm597 = vweird.f32 %v572
    %vm598 = vweird.f32 %v592
    %vm599 = vmor %vm597, %vm598
    %v600 = vsel %vm599, %v592, %v596
    %v601 = vand.u32 2147483647, %v572
    %vm602 = vcmp.eq.f32.partialorder %v601, 8.507059e+37
    %v603 = vand.u32 %v572, 2147483648
    %v604 = vor.u32 1.1754944e-38, %v603
    %v605 = vsel %vm602, %v604, %v600
    %v606 = vmul.f32 1.0, %v605
    %v607 = vrcp.pop %v573
    %v608 = vmul.f32 %v573, %v607
    %v609 = vsub.f32 1.0, %v608
    %v610 = vmul.f32 %v607, %v609
    %v611 = vadd.f32 %v607, %v610
    %vm612 = vweird.f32 %v573
    %vm613 = vweird.f32 %v607
    %vm614 = vmor %vm612, %vm613
    %v615 = vsel %vm614, %v607, %v611
    %v616 = vand.u32 2147483647, %v573
    %vm617 = vcmp.eq.f32.partialorder %v616, 8.507059e+37
    %v618 = vand.u32 %v573, 2147483648
    %v619 = vor.u32 1.1754944e-38, %v618
    %v620 = vsel %vm617, %v619, %v615
    %v621 = vmul.f32 1.0, %v620
    %v622 = vrcp.pop %v574
    %v623 = vmul.f32 %v574, %v622
    %v624 = vsub.f32 1.0, %v623
    %v625 = vmul.f32 %v622, %v624
    %v626 = vadd.f32 %v622, %v625
    %vm627 = vweird.f32 %v574
    %vm628 = vweird.f32 %v622
    %vm629 = vmor %vm627, %vm628
    %v630 = vsel %vm629, %v622, %v626
    %v631 = vand.u32 2147483647, %v574
    %vm632 = vcmp.eq.f32.partialorder %v631, 8.507059e+37
    %v633 = vand.u32 %v574, 2147483648
    %v634 = vor.u32 1.1754944e-38, %v633
    %v635 = vsel %vm632, %v634, %v630
    %v636 = vmul.f32 1.0, %v635
    %v637 = vrcp.pop %v575
    %v638 = vmul.f32 %v575, %v637
    %v639 = vsub.f32 1.0, %v638
    %v640 = vmul.f32 %v637, %v639
    %v641 = vadd.f32 %v637, %v640
    %vm642 = vweird.f32 %v575
    %vm643 = vweird.f32 %v637
    %vm644 = vmor %vm642, %vm643
    %v645 = vsel %vm644, %v637, %v641
    %v646 = vand.u32 2147483647, %v575
    %vm647 = vcmp.eq.f32.partialorder %v646, 8.507059e+37
    %v648 = vand.u32 %v575, 2147483648
    %v649 = vor.u32 1.1754944e-38, %v648
    %v650 = vsel %vm647, %v649, %v645
    %v651 = vmul.f32 1.0, %v650
    %v652 = vrcp.pop %v576
    %v653 = vmul.f32 %v576, %v652
    %v654 = vsub.f32 1.0, %v653
    %v655 = vmul.f32 %v652, %v654
    %v656 = vadd.f32 %v652, %v655
    %vm657 = vweird.f32 %v576
    %vm658 = vweird.f32 %v652
    %vm659 = vmor %vm657, %vm658
    %v660 = vsel %vm659, %v652, %v656
    %v661 = vand.u32 2147483647, %v576
    %vm662 = vcmp.eq.f32.partialorder %v661, 8.507059e+37
    %v663 = vand.u32 %v576, 2147483648
    %v664 = vor.u32 1.1754944e-38, %v663
    %v665 = vsel %vm662, %v664, %v660
    %v666 = vmul.f32 1.0, %v665
    %v667 = vld [vmem:[%s6] sm:$0x7]
    %v669 = vperm.slane %v667, 0
    %v670 = vperm.slane %v667, 1
    %v671 = vperm.slane %v667, 2
    %v675 = vadd.f32 %v259, %v669
    %v676 = vadd.f32 %v272, %v670
    %v677 = vadd.f32 %v285, %v671
    %v678 = vld [vmem:[#allocation8] sm:$0x7]
    %v680 = vperm.slane %v678, 0
    %v681 = vperm.slane %v678, 1
    %v682 = vperm.slane %v678, 2
    %v686 = vadd.f32 %v491, %v680
    %v687 = vadd.f32 %v504, %v681
    %v688 = vadd.f32 %v517, %v682
    %v689 = vmul.f32 %v591, %v686
    %v690 = vmul.f32 %v606, %v687
    %v691 = vmul.f32 %v621, %v688
    %v692 = vadd.f32 %v675, %v689
    %v693 = vadd.f32 %v676, %v690
    %v694 = vadd.f32 %v677, %v691
    %v695 = vtanh.pop %v692
    %v696 = vtanh.pop %v693
    %v697 = vtanh.pop %v694
    %v698 = vld [vmem:[%s2] sm:$0xff]
    %v699 = vsub.f32 1.0, %v636
    %v700 = vmul.f32 %v699, %v695
    %v701 = vmul.f32 %v636, %v90
    %v702 = vadd.f32 %v700, %v701
    %v703 = vmul.f32 %v702, %v530
    %704 = vadd.xlane.f32.xlu0 %v703
    %v705 = vpop.xlane.xlu0 %704
    %v706 = vadd.f32 %v705, %v698
    %vm707 = vcmp.gt.f32.partialorder %v706, -inf
    %v708 = vsel %vm707, %v706, -inf
    %v709 = vsel %vm707, 1, 0
    %710 = vset.pattern.permute.xlu0 0
    %711 = vperm.xlu0 %710, %v709
    %v712 = vpop.permute.xlu0 %711
    %vm713 = vcmp.eq.s32.totalorder %v712, 1
    %v714 = vsel %vm713, %v702, 0.0
    %v715 = vsub.f32 1.0, %v651
    %v716 = vmul.f32 %v715, %v696
    %v717 = vmul.f32 %v651, %v90
    %v718 = vadd.f32 %v716, %v717
    %v719 = vmul.f32 %v718, %v530
    %720 = vadd.xlane.f32.xlu0 %v719
    %v721 = vpop.xlane.xlu0 %720
    %v722 = vadd.f32 %v721, %v698
    %724 = vrot.lane.b32.xlu0 %v708, 1
    %v725 = vpop.permute.xlu0 %724
    %vm727 = vcmp.gt.f32.partialorder %v722, %v725
    %v728 = vsel %vm727, %v722, %v725
    %v729 = vsel %vm727, 1, 0
    %730 = vset.pattern.permute.xlu0 1
    %731 = vperm.xlu0 %730, %v729
    %v732 = vpop.permute.xlu0 %731
    %vm733 = vcmp.eq.s32.totalorder %v732, 1
    %v734 = vsel %vm733, %v718, %v714
    %v735 = vsub.f32 1.0, %v666
    %v736 = vmul.f32 %v735, %v697
    %v737 = vmul.f32 %v666, %v90
    %v738 = vadd.f32 %v736, %v737
    %v739 = vmul.f32 %v738, %v530
    %740 = vadd.xlane.f32.xlu0 %v739
    %v741 = vpop.xlane.xlu0 %740
    %v742 = vadd.f32 %v741, %v698
    %744 = vrot.lane.b32.xlu0 %v728, 1
    %v745 = vpop.permute.xlu0 %744
    %vm747 = vcmp.gt.f32.partialorder %v742, %v745
    %748 = vrot.lane.b32.xlu0 %v729, 1
    %v749 = vpop.permute.xlu0 %748
    %v750 = vsel %vm747, 2, %v749
    %v751 = vsel %vm747, 1, 0
    %752 = vset.pattern.permute.xlu0 2
    %753 = vperm.xlu0 %752, %v751
    %v754 = vpop.permute.xlu0 %753
    %vm755 = vcmp.eq.s32.totalorder %v754, 1
    %v756 = vsel %vm755, %v738, %v734
    %v757 = vlaneseq
    %v758 = vand.u32 %v757, 127
    %v759 = vadd.s32 %v750, 8
    %760 = vset.pattern.permute.xlu0 2
    %761 = vperm.xlu0 %760, %v759
    %v762 = vpop.permute.xlu0 %761
    %vm763 = vcmp.eq.s32.totalorder %v758, %v762
    %v764 = vsel %vm763, 1, 0
    %v765 = vcvt.s32.f32 %v764
    %v766 = vadd.f32 %v756, %v765
    %767 = vst [vmem:[#allocation10] sm:$0xff] %v766
    // Predicated region
    $region50: #{tpu_custom_call.1} parent=1 // pred_check
      _
    $region51: #{tpu_custom_call.1} parent=1 // pred_check_branch
      %769 = sbr.rel (0) target = $region53
    $region52: #{tpu_custom_call.1} parent=1 // pred_region
      %771 = vsyncadd [#allocation4], 0
      %s773 = sshll.u32 [#allocation10], 4
      %s774 = int_to_ptr.vmem [resolvable:$true] %s773
      %s775 = sshll.u32 %s8, 4
      %s776 = int_to_ptr.hbm [resolvable:$true] %s775
      %778 = dma.vmem_to_hbm [thread:$0]  %s774, 128, %s776, [#allocation4]
    $region53: #{tpu_custom_call.1} parent=1 // pred_fallthru
      _
    // Predicated region
    $region54: #{tpu_custom_call.1} parent=1 // pred_check
      _
    $region55: #{tpu_custom_call.1} parent=1 // pred_check_branch
      %780 = sbr.rel (0) target = $region57
    $region56: #{tpu_custom_call.1} parent=1 // pred_region
      %782 = dma.done [#allocation4], 128
    $region57: #{tpu_custom_call.1} parent=1 // pred_fallthru
      _
    %783 = vsyncpa [#allocation3], 1
    %784 = vsyncpa [#allocation6], 1
    %785 = vsyncpa [#allocation9], 1
    %786 = vsyncpa [#allocation4], 1

</llo_original>
